<compile_context>
chip_gen: v7x
topology: tpu7x:2x2x1
jax: 0.10.0
libtpu: 0.0.40
codegen_flags: <defaults>
</compile_context>

<pallas_src>
import math

import numpy as np
import jax
import jax.numpy as jnp
from jax.experimental import pallas as pl
from jax.experimental.pallas import tpu as pltpu

# ---- hyperparameters consistent with Classifier.__init__ (small test config) ----
NUM_INPUTS = 4      # input channels
NUM_CLASS = 5
DEPTH = 3
NLAYER = 2
KERNEL_SIZE = 3
HIDDEN_CONV = 8
MAX_HIDDEN = 16
NUM_OUTPUTS = 8     # embedding size
BATCH = 2
SEQ_LEN = 16
LANES = 128         # lane width of the packed constant slabs and the merged output


def _round_up(n, m):
    return (n + m - 1) // m * m


# ----------------------------------------------------------------------------
# Static layer plan (mirrors Classifier.__init__ network construction)
# ----------------------------------------------------------------------------
def _make_plan():
    plan = [("res", NUM_INPUTS, HIDDEN_CONV)]
    for _ in range(NLAYER - 1):
        plan.append(("res", HIDDEN_CONV, HIDDEN_CONV))
    h = HIDDEN_CONV
    for i in range(DEPTH - 1):
        h0 = min(MAX_HIDDEN, HIDDEN_CONV * 2 ** i)
        h = min(MAX_HIDDEN, HIDDEN_CONV * 2 ** (i + 1))
        plan.append(("pool", None, None))
        plan.append(("res", h0, h))
        for _ in range(NLAYER - 1):
            plan.append(("res", h, h))
    return plan, h


# ----------------------------------------------------------------------------
# Parameter initialization (weight_norm folded into plain conv weights)
# ----------------------------------------------------------------------------
def _init_conv(key, k, cin, cout):
    kw, kb = jax.random.split(key)
    bound = 1.0 / math.sqrt(cin * k)
    w = jax.random.uniform(kw, (k, cin, cout), jnp.float32, -bound, bound)
    b = jax.random.uniform(kb, (cout,), jnp.float32, -bound, bound)
    return w, b


def _init_dense(key, cin, cout):
    kw, kb = jax.random.split(key)
    bound = 1.0 / math.sqrt(cin)
    w = jax.random.uniform(kw, (cin, cout), jnp.float32, -bound, bound)   # (in, out)
    b = jax.random.uniform(kb, (cout,), jnp.float32, -bound, bound)
    return w, b


def init_params(key):
    plan, h = _make_plan()
    layers = []
    for entry in plan:
        if entry[0] == "pool":
            layers.append({"type": "pool"})
            continue
        _, cin, cout = entry
        key, k1, k2, k0 = jax.random.split(key, 4)
        w1, b1 = _init_conv(k1, KERNEL_SIZE, cin, cout)   # tap t applies to x[l + t - 1]
        w2, b2 = _init_conv(k2, KERNEL_SIZE, cout, cout)
        layer = {"type": "res", "w1": w1, "b1": b1, "w2": w2, "b2": b2}
        if cin != cout:                                    # 1x1 shortcut conv
            w0, b0 = _init_conv(k0, 1, cin, cout)
            layer["w0"] = w0[0]                            # (cin, cout)
            layer["b0"] = b0
        layers.append(layer)
    key, kl, kd1, kd2 = jax.random.split(key, 4)
    wl, bl = _init_conv(kl, 1, h, NUM_OUTPUTS)             # self.linear = Conv1d(h, num_outputs, 1)
    wd1, bd1 = _init_dense(kd1, NUM_OUTPUTS, NUM_OUTPUTS)
    wd2, bd2 = _init_dense(kd2, NUM_OUTPUTS, NUM_CLASS)
    # fold the 1x1 linear conv into dense1 (both linear; no nonlinearity between them)
    wf = wl[0] @ wd1                                       # (h, num_outputs)
    bf = bl @ wd1 + bd1
    head = {"wf": wf, "bf": bf,
            "gamma": jnp.ones((NUM_OUTPUTS,), jnp.float32),
            "beta": jnp.zeros((NUM_OUTPUTS,), jnp.float32),
            "wd2": wd2, "bd2": bd2}
    return {"layers": layers, "head": head}


# ----------------------------------------------------------------------------
# Host-side packing: everything into 2 sublane-aligned, 128-lane VMEM slabs
# ----------------------------------------------------------------------------
def pack_params(params, B, L0):
    plan, h_final = _make_plan()
    wmats = []   # (name, 2D np array) -> weight slab, each sub-block 8-row aligned
    brows = []   # (name, 1D np array) -> bias slab, one row per vector
    ops = []     # static op list consumed by the kernel closure

    L = L0
    pool_i = 0
    for li, entry in enumerate(plan):
        layer = params["layers"][li]
        if entry[0] == "pool":
            N = B * L
            S = np.zeros((N // 2, N), np.float32)          # even-row selector (constant)
            S[np.arange(N // 2), 2 * np.arange(N // 2)] = 1.0
            name = f"pool{pool_i}"
            wmats.append((name, S))
            ops.append(("pool", name))
            pool_i += 1
            L //= 2
            continue
        _, cin, cout = entry
        # pack the 3 conv taps along rows: [w[0]; w[1]; w[2]] -> (3*cin, cout)
        w1 = np.asarray(layer["w1"], np.float32).reshape(KERNEL_SIZE * cin, cout)
        w2 = np.asarray(layer["w2"], np.float32).reshape(KERNEL_SIZE * cout, cout)
        wmats.append((f"w1_{li}", w1))
        wmats.append((f"w2_{li}", w2))
        brows.append((f"b1_{li}", np.asarray(layer["b1"], np.float32).reshape(-1)))
        brows.append((f"b2_{li}", np.asarray(layer["b2"], np.float32).reshape(-1)))
        names = {"w1": f"w1_{li}", "b1": f"b1_{li}",
                 "w2": f"w2_{li}", "b2": f"b2_{li}", "L": L}
        if "w0" in layer:
            wmats.append((f"w0_{li}", np.asarray(layer["w0"], np.float32)))
            brows.append((f"b0_{li}", np.asarray(layer["b0"], np.float32).reshape(-1)))
            names["w0"] = f"w0_{li}"
            names["b0"] = f"b0_{li}"
        ops.append(("res", names))

    hp = params["head"]
    wmats.append(("wf", np.asarray(hp["wf"], np.float32)))
    wmats.append(("wd2", np.asarray(hp["wd2"], np.float32)))
    brows.append(("bf", np.asarray(hp["bf"], np.float32).reshape(-1)))
    brows.append(("gamma", np.asarray(hp["gamma"], np.float32).reshape(-1)))
    brows.append(("beta", np.asarray(hp["beta"], np.float32).reshape(-1)))
    brows.append(("bd2", np.asarray(hp["bd2"], np.float32).reshape(-1)))

    # weight slab: each matrix starts at an 8-row boundary, lanes [0:cols) hold data
    wmeta = {}
    off = 0
    for name, m in wmats:
        r, c = m.shape
        wmeta[name] = (off, r, c)
        off += _round_up(r, 8)
    wbuf = np.zeros((max(_round_up(off, 8), 8), LANES), np.float32)
    for name, m in wmats:
        o, r, c = wmeta[name]
        wbuf[o:o + r, :c] = m

    # bias slab: one row per vector
    bmeta = {}
    bbuf = np.zeros((max(_round_up(len(brows), 8), 8), LANES), np.float32)
    for i, (name, v) in enumerate(brows):
        bmeta[name] = (i, v.shape[0])
        bbuf[i, :v.shape[0]] = v

    static = {"ops": ops, "wmeta": wmeta, "bmeta": bmeta,
              "B": B, "L0": L0, "L_final": L, "h_final": h_final}
    return jnp.asarray(wbuf), jnp.asarray(bbuf), static


# ----------------------------------------------------------------------------
# Fully fused forward kernel
# ----------------------------------------------------------------------------
def _make_kernel(static):
    ops = static["ops"]
    wmeta = static["wmeta"]
    bmeta = static["bmeta"]
    B = static["B"]
    L_final = static["L_final"]

    def kernel(x_ref, w_ref, b_ref, o_ref):
        biases = b_ref[...]                                  # one small load; sliced below

        def weight(name):                                    # static slice of the weight slab
            off, r, c = wmeta[name]
            return w_ref[off:off + r, :c]

        def bias(name):                                      # static row of the bias slab
            row, c = bmeta[name]
            return biases[row:row + 1, :c]

        def dot(a, b):
            return jnp.dot(a, b, preferred_element_type=jnp.float32)

        def conv3(v, L, wname, bname):
            # zero-padded k=3 conv + bias + ReLU on a merged (B*L, C) channels-last tile.
            # Neighbours via a 1-row sublane shift + per-sample boundary mask (VPU/XLU),
            # all 3 taps fused into a single MXU matmul against the packed (3C, Cout) weight.
            N, C = v.shape
            pos = jax.lax.broadcasted_iota(jnp.int32, (N, C), 0) & (L - 1)
            z = jnp.zeros((1, C), jnp.float32)
            prev = jnp.where(pos == 0, 0.0,
                             jnp.concatenate([z, v[:N - 1, :]], axis=0))     # x[l-1]
            nxt = jnp.where(pos == L - 1, 0.0,
                            jnp.concatenate([v[1:, :], z], axis=0))          # x[l+1]
            x3 = jnp.concatenate([prev, v, nxt], axis=1)                     # (N, 3C)
            return jnp.maximum(dot(x3, weight(wname)) + bias(bname), 0.0)

        x = x_ref[...].astype(jnp.float32)                   # (B*L0, Cin)

        for op in ops:
            if op[0] == "pool":
                # MaxPool(2,2): pairwise max on the VPU, then one tiny even-row
                # selector matmul (constant lives in the packed weight slab).
                _, sname = op
                N, C = x.shape
                nxt = jnp.concatenate([x[1:, :], jnp.zeros((1, C), jnp.float32)], axis=0)
                y = jnp.maximum(x, nxt)                      # y[2r] = max(x[2r], x[2r+1])
                x = dot(weight(sname), y)                    # (N/2, C)
            else:
                p = op[1]
                h1 = conv3(x, p["L"], p["w1"], p["b1"])
                h2 = conv3(h1, p["L"], p["w2"], p["b2"])
                if "w0" in p:                                # 1x1 shortcut conv
                    sc = dot(x, weight(p["w0"])) + bias(p["b0"])
                else:
                    sc = x
                x = h2 + sc                                  # residual AFTER the 2nd ReLU

        # ---- classifier head -------------------------------------------------
        Lf = L_final
        rows = [x[b * Lf + Lf - 1: b * Lf + Lf, :] for b in range(B)]        # last step / sample
        feat = rows[0] if B == 1 else jnp.concatenate(rows, axis=0)          # (B, h)
        # folded (1x1 `self.linear`) ∘ dense1, then ReLU
        zv = jnp.maximum(dot(feat, weight("wf")) + bias("bf"), 0.0)          # (B, num_outputs)
        # F.normalize(p=2, dim=-1, eps=1e-12)
        nrm = jnp.sqrt(jnp.sum(zv * zv, axis=-1, keepdims=True))
        z1 = zv / jnp.maximum(nrm, 1e-12)
        # classify: ReLU -> BatchNorm1d (training-mode batch stats) -> dense2
        t = jnp.maximum(z1, 0.0)
        mu = jnp.mean(t, axis=0, keepdims=True)
        var = jnp.mean((t - mu) ** 2, axis=0, keepdims=True)                 # biased variance
        tn = (t - mu) * jax.lax.rsqrt(var + 1e-5) * bias("gamma") + bias("beta")
        o2 = dot(tn, weight("wd2")) + bias("bd2")                            # (B, num_class)

        # single lane-dense output slab: cols [0:8) = logprob1, [8:13) = logprob2
        o_ref[...] = jnp.zeros(o_ref.shape, jnp.float32)
        o_ref[:, 0:NUM_OUTPUTS] = z1
        o_ref[:, NUM_OUTPUTS:NUM_OUTPUTS + NUM_CLASS] = o2

    return kernel


# ----------------------------------------------------------------------------
# Forward pass: single fused pallas_call (3 input DMAs, 1 output DMA)
# ----------------------------------------------------------------------------
def classifier_forward(wbuf, bbuf, static, x_ncl):
    B, C, L0 = x_ncl.shape
    # PyTorch-style (B, C, L) -> channels-last with batch folded into the row axis.
    x0 = jnp.transpose(x_ncl, (0, 2, 1)).reshape(B * L0, C).astype(jnp.float32)

    kernel = _make_kernel(static)
    vmem = pltpu.MemorySpace.VMEM
    out = pl.pallas_call(
        kernel,
        out_shape=jax.ShapeDtypeStruct((B, LANES), jnp.float32),
        in_specs=[pl.BlockSpec(memory_space=vmem),
                  pl.BlockSpec(memory_space=vmem),
                  pl.BlockSpec(memory_space=vmem)],
        out_specs=pl.BlockSpec(memory_space=vmem),
    )(x0, wbuf, bbuf)
    logprob1 = out[:, :NUM_OUTPUTS]
    logprob2 = out[:, NUM_OUTPUTS:NUM_OUTPUTS + NUM_CLASS]
    return logprob1, logprob2


if __name__ == "__main__":
    key = jax.random.PRNGKey(0)
    pkey, xkey = jax.random.split(key)
    params = init_params(pkey)
    wbuf, bbuf, static = pack_params(params, BATCH, SEQ_LEN)

    x = jax.random.normal(xkey, (BATCH, NUM_INPUTS, SEQ_LEN), jnp.float32)   # NCL like PyTorch
    fwd = jax.jit(lambda inp: classifier_forward(wbuf, bbuf, static, inp))
    logprob1, logprob2 = fwd(x)
    jax.block_until_ready((logprob1, logprob2))

    assert logprob1.shape == (BATCH, NUM_OUTPUTS)
    assert logprob2.shape == (BATCH, NUM_CLASS)
    assert bool(jnp.all(jnp.isfinite(logprob1))) and bool(jnp.all(jnp.isfinite(logprob2)))
    print("KERNEL_OK")
</pallas_src>

<mosaic_0001>
module attributes {stable_mosaic.version = 11 : i64} {
  func.func @kernel(%arg0: memref<32x4xf32, #tpu.memory_space<vmem>>, %arg1: memref<512x128xf32, #tpu.memory_space<vmem>>, %arg2: memref<24x128xf32, #tpu.memory_space<vmem>>, %arg3: memref<2x128xf32, #tpu.memory_space<vmem>>) attributes {dimension_semantics = [], scalar_prefetch = 0 : i64, scratch_operands = 0 : i64, tpu.core_type = #tpu.core_type<tc>} {
    %c0 = arith.constant 0 : index
    %c0_0 = arith.constant 0 : index
    %0 = vector.load %arg2[%c0, %c0_0] : memref<24x128xf32, #tpu.memory_space<vmem>>, vector<24x128xf32>
    %c0_1 = arith.constant 0 : index
    %c0_2 = arith.constant 0 : index
    %1 = vector.load %arg0[%c0_1, %c0_2] : memref<32x4xf32, #tpu.memory_space<vmem>>, vector<32x4xf32>
    %2 = tpu.iota {dimensions = array<i32: 0>} : vector<32x4xi32>
    %c15_i32 = arith.constant 15 : i32
    %3 = vector.broadcast %c15_i32 : i32 to vector<32x4xi32>
    %4 = arith.andi %2, %3 : vector<32x4xi32>
    %cst = arith.constant 0.000000e+00 : f32
    %5 = vector.broadcast %cst : f32 to vector<1x4xf32>
    %c0_i32 = arith.constant 0 : i32
    %6 = vector.broadcast %c0_i32 : i32 to vector<32x4xi32>
    %7 = arith.cmpi eq, %4, %6 : vector<32x4xi32>
    %8 = vector.extract_strided_slice %1 {offsets = [0, 0], sizes = [31, 4], strides = [1, 1]} : vector<32x4xf32> to vector<31x4xf32>
    %9 = tpu.concatenate %5, %8 in 0 : vector<1x4xf32>, vector<31x4xf32> -> vector<32x4xf32>
    %cst_3 = arith.constant 0.000000e+00 : f32
    %10 = vector.broadcast %cst_3 : f32 to vector<32x4xf32>
    %11 = arith.select %7, %10, %9 : vector<32x4xi1>, vector<32x4xf32>
    %c15_i32_4 = arith.constant 15 : i32
    %12 = vector.broadcast %c15_i32_4 : i32 to vector<32x4xi32>
    %13 = arith.cmpi eq, %4, %12 : vector<32x4xi32>
    %14 = vector.extract_strided_slice %1 {offsets = [1, 0], sizes = [31, 4], strides = [1, 1]} : vector<32x4xf32> to vector<31x4xf32>
    %15 = tpu.concatenate %14, %5 in 0 : vector<31x4xf32>, vector<1x4xf32> -> vector<32x4xf32>
    %cst_5 = arith.constant 0.000000e+00 : f32
    %16 = vector.broadcast %cst_5 : f32 to vector<32x4xf32>
    %17 = arith.select %13, %16, %15 : vector<32x4xi1>, vector<32x4xf32>
    %18 = tpu.concatenate %11, %1, %17 in 1 : vector<32x4xf32>, vector<32x4xf32>, vector<32x4xf32> -> vector<32x12xf32>
    %c0_6 = arith.constant 0 : index
    %c0_7 = arith.constant 0 : index
    %19 = vector.load %arg1[%c0_6, %c0_7] : memref<512x128xf32, #tpu.memory_space<vmem>>, vector<12x8xf32>
    %cst_8 = arith.constant dense<0.000000e+00> : vector<32x8xf32>
    %20 = tpu.matmul %18, %19, %cst_8 {dimension_numbers = #tpu.dot_dimension_numbers<[1], [0], [0], [1], [0, 0, 1, 1], [], []>} : vector<32x12xf32>, vector<12x8xf32>, vector<32x8xf32> -> vector<32x8xf32>
    %21 = vector.extract_strided_slice %0 {offsets = [0, 0], sizes = [1, 8], strides = [1, 1]} : vector<24x128xf32> to vector<1x8xf32>
    %22 = vector.broadcast %21 : vector<1x8xf32> to vector<32x8xf32>
    %23 = arith.addf %20, %22 : vector<32x8xf32>
    %cst_9 = arith.constant 0.000000e+00 : f32
    %24 = vector.broadcast %cst_9 : f32 to vector<32x8xf32>
    %25 = arith.maximumf %23, %24 : vector<32x8xf32>
    %26 = tpu.iota {dimensions = array<i32: 0>} : vector<32x8xi32>
    %c15_i32_10 = arith.constant 15 : i32
    %27 = vector.broadcast %c15_i32_10 : i32 to vector<32x8xi32>
    %28 = arith.andi %26, %27 : vector<32x8xi32>
    %cst_11 = arith.constant 0.000000e+00 : f32
    %29 = vector.broadcast %cst_11 : f32 to vector<1x8xf32>
    %c0_i32_12 = arith.constant 0 : i32
    %30 = vector.broadcast %c0_i32_12 : i32 to vector<32x8xi32>
    %31 = arith.cmpi eq, %28, %30 : vector<32x8xi32>
    %32 = vector.extract_strided_slice %25 {offsets = [0, 0], sizes = [31, 8], strides = [1, 1]} : vector<32x8xf32> to vector<31x8xf32>
    %33 = tpu.concatenate %29, %32 in 0 : vector<1x8xf32>, vector<31x8xf32> -> vector<32x8xf32>
    %cst_13 = arith.constant 0.000000e+00 : f32
    %34 = vector.broadcast %cst_13 : f32 to vector<32x8xf32>
    %35 = arith.select %31, %34, %33 : vector<32x8xi1>, vector<32x8xf32>
    %c15_i32_14 = arith.constant 15 : i32
    %36 = vector.broadcast %c15_i32_14 : i32 to vector<32x8xi32>
    %37 = arith.cmpi eq, %28, %36 : vector<32x8xi32>
    %38 = vector.extract_strided_slice %25 {offsets = [1, 0], sizes = [31, 8], strides = [1, 1]} : vector<32x8xf32> to vector<31x8xf32>
    %39 = tpu.concatenate %38, %29 in 0 : vector<31x8xf32>, vector<1x8xf32> -> vector<32x8xf32>
    %cst_15 = arith.constant 0.000000e+00 : f32
    %40 = vector.broadcast %cst_15 : f32 to vector<32x8xf32>
    %41 = arith.select %37, %40, %39 : vector<32x8xi1>, vector<32x8xf32>
    %42 = tpu.concatenate %35, %25, %41 in 1 : vector<32x8xf32>, vector<32x8xf32>, vector<32x8xf32> -> vector<32x24xf32>
    %c16 = arith.constant 16 : index
    %c0_16 = arith.constant 0 : index
    %43 = vector.load %arg1[%c16, %c0_16] : memref<512x128xf32, #tpu.memory_space<vmem>>, vector<24x8xf32>
    %cst_17 = arith.constant dense<0.000000e+00> : vector<32x8xf32>
    %44 = tpu.matmul %42, %43, %cst_17 {dimension_numbers = #tpu.dot_dimension_numbers<[1], [0], [0], [1], [0, 0, 1, 1], [], []>} : vector<32x24xf32>, vector<24x8xf32>, vector<32x8xf32> -> vector<32x8xf32>
    %45 = vector.extract_strided_slice %0 {offsets = [1, 0], sizes = [1, 8], strides = [1, 1]} : vector<24x128xf32> to vector<1x8xf32>
    %46 = vector.broadcast %45 : vector<1x8xf32> to vector<32x8xf32>
    %47 = arith.addf %44, %46 : vector<32x8xf32>
    %cst_18 = arith.constant 0.000000e+00 : f32
    %48 = vector.broadcast %cst_18 : f32 to vector<32x8xf32>
    %49 = arith.maximumf %47, %48 : vector<32x8xf32>
    %c40 = arith.constant 40 : index
    %c0_19 = arith.constant 0 : index
    %50 = vector.load %arg1[%c40, %c0_19] : memref<512x128xf32, #tpu.memory_space<vmem>>, vector<4x8xf32>
    %cst_20 = arith.constant dense<0.000000e+00> : vector<32x8xf32>
    %51 = tpu.matmul %1, %50, %cst_20 {dimension_numbers = #tpu.dot_dimension_numbers<[1], [0], [0], [1], [0, 0, 1, 1], [], []>} : vector<32x4xf32>, vector<4x8xf32>, vector<32x8xf32> -> vector<32x8xf32>
    %52 = vector.extract_strided_slice %0 {offsets = [2, 0], sizes = [1, 8], strides = [1, 1]} : vector<24x128xf32> to vector<1x8xf32>
    %53 = vector.broadcast %52 : vector<1x8xf32> to vector<32x8xf32>
    %54 = arith.addf %51, %53 : vector<32x8xf32>
    %55 = arith.addf %49, %54 : vector<32x8xf32>
    %56 = tpu.iota {dimensions = array<i32: 0>} : vector<32x8xi32>
    %c15_i32_21 = arith.constant 15 : i32
    %57 = vector.broadcast %c15_i32_21 : i32 to vector<32x8xi32>
    %58 = arith.andi %56, %57 : vector<32x8xi32>
    %cst_22 = arith.constant 0.000000e+00 : f32
    %59 = vector.broadcast %cst_22 : f32 to vector<1x8xf32>
    %c0_i32_23 = arith.constant 0 : i32
    %60 = vector.broadcast %c0_i32_23 : i32 to vector<32x8xi32>
    %61 = arith.cmpi eq, %58, %60 : vector<32x8xi32>
    %62 = vector.extract_strided_slice %55 {offsets = [0, 0], sizes = [31, 8], strides = [1, 1]} : vector<32x8xf32> to vector<31x8xf32>
    %63 = tpu.concatenate %59, %62 in 0 : vector<1x8xf32>, vector<31x8xf32> -> vector<32x8xf32>
    %cst_24 = arith.constant 0.000000e+00 : f32
    %64 = vector.broadcast %cst_24 : f32 to vector<32x8xf32>
    %65 = arith.select %61, %64, %63 : vector<32x8xi1>, vector<32x8xf32>
    %c15_i32_25 = arith.constant 15 : i32
    %66 = vector.broadcast %c15_i32_25 : i32 to vector<32x8xi32>
    %67 = arith.cmpi eq, %58, %66 : vector<32x8xi32>
    %68 = vector.extract_strided_slice %55 {offsets = [1, 0], sizes = [31, 8], strides = [1, 1]} : vector<32x8xf32> to vector<31x8xf32>
    %69 = tpu.concatenate %68, %59 in 0 : vector<31x8xf32>, vector<1x8xf32> -> vector<32x8xf32>
    %cst_26 = arith.constant 0.000000e+00 : f32
    %70 = vector.broadcast %cst_26 : f32 to vector<32x8xf32>
    %71 = arith.select %67, %70, %69 : vector<32x8xi1>, vector<32x8xf32>
    %72 = tpu.concatenate %65, %55, %71 in 1 : vector<32x8xf32>, vector<32x8xf32>, vector<32x8xf32> -> vector<32x24xf32>
    %c48 = arith.constant 48 : index
    %c0_27 = arith.constant 0 : index
    %73 = vector.load %arg1[%c48, %c0_27] : memref<512x128xf32, #tpu.memory_space<vmem>>, vector<24x8xf32>
    %cst_28 = arith.constant dense<0.000000e+00> : vector<32x8xf32>
    %74 = tpu.matmul %72, %73, %cst_28 {dimension_numbers = #tpu.dot_dimension_numbers<[1], [0], [0], [1], [0, 0, 1, 1], [], []>} : vector<32x24xf32>, vector<24x8xf32>, vector<32x8xf32> -> vector<32x8xf32>
    %75 = vector.extract_strided_slice %0 {offsets = [3, 0], sizes = [1, 8], strides = [1, 1]} : vector<24x128xf32> to vector<1x8xf32>
    %76 = vector.broadcast %75 : vector<1x8xf32> to vector<32x8xf32>
    %77 = arith.addf %74, %76 : vector<32x8xf32>
    %cst_29 = arith.constant 0.000000e+00 : f32
    %78 = vector.broadcast %cst_29 : f32 to vector<32x8xf32>
    %79 = arith.maximumf %77, %78 : vector<32x8xf32>
    %80 = tpu.iota {dimensions = array<i32: 0>} : vector<32x8xi32>
    %c15_i32_30 = arith.constant 15 : i32
    %81 = vector.broadcast %c15_i32_30 : i32 to vector<32x8xi32>
    %82 = arith.andi %80, %81 : vector<32x8xi32>
    %cst_31 = arith.constant 0.000000e+00 : f32
    %83 = vector.broadcast %cst_31 : f32 to vector<1x8xf32>
    %c0_i32_32 = arith.constant 0 : i32
    %84 = vector.broadcast %c0_i32_32 : i32 to vector<32x8xi32>
    %85 = arith.cmpi eq, %82, %84 : vector<32x8xi32>
    %86 = vector.extract_strided_slice %79 {offsets = [0, 0], sizes = [31, 8], strides = [1, 1]} : vector<32x8xf32> to vector<31x8xf32>
    %87 = tpu.concatenate %83, %86 in 0 : vector<1x8xf32>, vector<31x8xf32> -> vector<32x8xf32>
    %cst_33 = arith.constant 0.000000e+00 : f32
    %88 = vector.broadcast %cst_33 : f32 to vector<32x8xf32>
    %89 = arith.select %85, %88, %87 : vector<32x8xi1>, vector<32x8xf32>
    %c15_i32_34 = arith.constant 15 : i32
    %90 = vector.broadcast %c15_i32_34 : i32 to vector<32x8xi32>
    %91 = arith.cmpi eq, %82, %90 : vector<32x8xi32>
    %92 = vector.extract_strided_slice %79 {offsets = [1, 0], sizes = [31, 8], strides = [1, 1]} : vector<32x8xf32> to vector<31x8xf32>
    %93 = tpu.concatenate %92, %83 in 0 : vector<31x8xf32>, vector<1x8xf32> -> vector<32x8xf32>
    %cst_35 = arith.constant 0.000000e+00 : f32
    %94 = vector.broadcast %cst_35 : f32 to vector<32x8xf32>
    %95 = arith.select %91, %94, %93 : vector<32x8xi1>, vector<32x8xf32>
    %96 = tpu.concatenate %89, %79, %95 in 1 : vector<32x8xf32>, vector<32x8xf32>, vector<32x8xf32> -> vector<32x24xf32>
    %c72 = arith.constant 72 : index
    %c0_36 = arith.constant 0 : index
    %97 = vector.load %arg1[%c72, %c0_36] : memref<512x128xf32, #tpu.memory_space<vmem>>, vector<24x8xf32>
    %cst_37 = arith.constant dense<0.000000e+00> : vector<32x8xf32>
    %98 = tpu.matmul %96, %97, %cst_37 {dimension_numbers = #tpu.dot_dimension_numbers<[1], [0], [0], [1], [0, 0, 1, 1], [], []>} : vector<32x24xf32>, vector<24x8xf32>, vector<32x8xf32> -> vector<32x8xf32>
    %99 = vector.extract_strided_slice %0 {offsets = [4, 0], sizes = [1, 8], strides = [1, 1]} : vector<24x128xf32> to vector<1x8xf32>
    %100 = vector.broadcast %99 : vector<1x8xf32> to vector<32x8xf32>
    %101 = arith.addf %98, %100 : vector<32x8xf32>
    %cst_38 = arith.constant 0.000000e+00 : f32
    %102 = vector.broadcast %cst_38 : f32 to vector<32x8xf32>
    %103 = arith.maximumf %101, %102 : vector<32x8xf32>
    %104 = arith.addf %103, %55 : vector<32x8xf32>
    %105 = vector.extract_strided_slice %104 {offsets = [1, 0], sizes = [31, 8], strides = [1, 1]} : vector<32x8xf32> to vector<31x8xf32>
    %cst_39 = arith.constant 0.000000e+00 : f32
    %106 = vector.broadcast %cst_39 : f32 to vector<1x8xf32>
    %107 = tpu.concatenate %105, %106 in 0 : vector<31x8xf32>, vector<1x8xf32> -> vector<32x8xf32>
    %108 = arith.maximumf %104, %107 : vector<32x8xf32>
    %c96 = arith.constant 96 : index
    %c0_40 = arith.constant 0 : index
    %109 = vector.load %arg1[%c96, %c0_40] : memref<512x128xf32, #tpu.memory_space<vmem>>, vector<16x32xf32>
    %cst_41 = arith.constant dense<0.000000e+00> : vector<16x8xf32>
    %110 = tpu.matmul %109, %108, %cst_41 {dimension_numbers = #tpu.dot_dimension_numbers<[1], [0], [0], [1], [0, 0, 1, 1], [], []>} : vector<16x32xf32>, vector<32x8xf32>, vector<16x8xf32> -> vector<16x8xf32>
    %111 = tpu.iota {dimensions = array<i32: 0>} : vector<16x8xi32>
    %c7_i32 = arith.constant 7 : i32
    %112 = vector.broadcast %c7_i32 : i32 to vector<16x8xi32>
    %113 = arith.andi %111, %112 : vector<16x8xi32>
    %cst_42 = arith.constant 0.000000e+00 : f32
    %114 = vector.broadcast %cst_42 : f32 to vector<1x8xf32>
    %c0_i32_43 = arith.constant 0 : i32
    %115 = vector.broadcast %c0_i32_43 : i32 to vector<16x8xi32>
    %116 = arith.cmpi eq, %113, %115 : vector<16x8xi32>
    %117 = vector.extract_strided_slice %110 {offsets = [0, 0], sizes = [15, 8], strides = [1, 1]} : vector<16x8xf32> to vector<15x8xf32>
    %118 = tpu.concatenate %114, %117 in 0 : vector<1x8xf32>, vector<15x8xf32> -> vector<16x8xf32>
    %cst_44 = arith.constant 0.000000e+00 : f32
    %119 = vector.broadcast %cst_44 : f32 to vector<16x8xf32>
    %120 = arith.select %116, %119, %118 : vector<16x8xi1>, vector<16x8xf32>
    %c7_i32_45 = arith.constant 7 : i32
    %121 = vector.broadcast %c7_i32_45 : i32 to vector<16x8xi32>
    %122 = arith.cmpi eq, %113, %121 : vector<16x8xi32>
    %123 = vector.extract_strided_slice %110 {offsets = [1, 0], sizes = [15, 8], strides = [1, 1]} : vector<16x8xf32> to vector<15x8xf32>
    %124 = tpu.concatenate %123, %114 in 0 : vector<15x8xf32>, vector<1x8xf32> -> vector<16x8xf32>
    %cst_46 = arith.constant 0.000000e+00 : f32
    %125 = vector.broadcast %cst_46 : f32 to vector<16x8xf32>
    %126 = arith.select %122, %125, %124 : vector<16x8xi1>, vector<16x8xf32>
    %127 = tpu.concatenate %120, %110, %126 in 1 : vector<16x8xf32>, vector<16x8xf32>, vector<16x8xf32> -> vector<16x24xf32>
    %c112 = arith.constant 112 : index
    %c0_47 = arith.constant 0 : index
    %128 = vector.load %arg1[%c112, %c0_47] : memref<512x128xf32, #tpu.memory_space<vmem>>, vector<24x16xf32>
    %cst_48 = arith.constant dense<0.000000e+00> : vector<16x16xf32>
    %129 = tpu.matmul %127, %128, %cst_48 {dimension_numbers = #tpu.dot_dimension_numbers<[1], [0], [0], [1], [0, 0, 1, 1], [], []>} : vector<16x24xf32>, vector<24x16xf32>, vector<16x16xf32> -> vector<16x16xf32>
    %130 = vector.extract_strided_slice %0 {offsets = [5, 0], sizes = [1, 16], strides = [1, 1]} : vector<24x128xf32> to vector<1x16xf32>
    %131 = vector.broadcast %130 : vector<1x16xf32> to vector<16x16xf32>
    %132 = arith.addf %129, %131 : vector<16x16xf32>
    %cst_49 = arith.constant 0.000000e+00 : f32
    %133 = vector.broadcast %cst_49 : f32 to vector<16x16xf32>
    %134 = arith.maximumf %132, %133 : vector<16x16xf32>
    %135 = tpu.iota {dimensions = array<i32: 0>} : vector<16x16xi32>
    %c7_i32_50 = arith.constant 7 : i32
    %136 = vector.broadcast %c7_i32_50 : i32 to vector<16x16xi32>
    %137 = arith.andi %135, %136 : vector<16x16xi32>
    %cst_51 = arith.constant 0.000000e+00 : f32
    %138 = vector.broadcast %cst_51 : f32 to vector<1x16xf32>
    %c0_i32_52 = arith.constant 0 : i32
    %139 = vector.broadcast %c0_i32_52 : i32 to vector<16x16xi32>
    %140 = arith.cmpi eq, %137, %139 : vector<16x16xi32>
    %141 = vector.extract_strided_slice %134 {offsets = [0, 0], sizes = [15, 16], strides = [1, 1]} : vector<16x16xf32> to vector<15x16xf32>
    %142 = tpu.concatenate %138, %141 in 0 : vector<1x16xf32>, vector<15x16xf32> -> vector<16x16xf32>
    %cst_53 = arith.constant 0.000000e+00 : f32
    %143 = vector.broadcast %cst_53 : f32 to vector<16x16xf32>
    %144 = arith.select %140, %143, %142 : vector<16x16xi1>, vector<16x16xf32>
    %c7_i32_54 = arith.constant 7 : i32
    %145 = vector.broadcast %c7_i32_54 : i32 to vector<16x16xi32>
    %146 = arith.cmpi eq, %137, %145 : vector<16x16xi32>
    %147 = vector.extract_strided_slice %134 {offsets = [1, 0], sizes = [15, 16], strides = [1, 1]} : vector<16x16xf32> to vector<15x16xf32>
    %148 = tpu.concatenate %147, %138 in 0 : vector<15x16xf32>, vector<1x16xf32> -> vector<16x16xf32>
    %cst_55 = arith.constant 0.000000e+00 : f32
    %149 = vector.broadcast %cst_55 : f32 to vector<16x16xf32>
    %150 = arith.select %146, %149, %148 : vector<16x16xi1>, vector<16x16xf32>
    %151 = tpu.concatenate %144, %134, %150 in 1 : vector<16x16xf32>, vector<16x16xf32>, vector<16x16xf32> -> vector<16x48xf32>
    %c136 = arith.constant 136 : index
    %c0_56 = arith.constant 0 : index
    %152 = vector.load %arg1[%c136, %c0_56] : memref<512x128xf32, #tpu.memory_space<vmem>>, vector<48x16xf32>
    %cst_57 = arith.constant dense<0.000000e+00> : vector<16x16xf32>
    %153 = tpu.matmul %151, %152, %cst_57 {dimension_numbers = #tpu.dot_dimension_numbers<[1], [0], [0], [1], [0, 0, 1, 1], [], []>} : vector<16x48xf32>, vector<48x16xf32>, vector<16x16xf32> -> vector<16x16xf32>
    %154 = vector.extract_strided_slice %0 {offsets = [6, 0], sizes = [1, 16], strides = [1, 1]} : vector<24x128xf32> to vector<1x16xf32>
    %155 = vector.broadcast %154 : vector<1x16xf32> to vector<16x16xf32>
    %156 = arith.addf %153, %155 : vector<16x16xf32>
    %cst_58 = arith.constant 0.000000e+00 : f32
    %157 = vector.broadcast %cst_58 : f32 to vector<16x16xf32>
    %158 = arith.maximumf %156, %157 : vector<16x16xf32>
    %c184 = arith.constant 184 : index
    %c0_59 = arith.constant 0 : index
    %159 = vector.load %arg1[%c184, %c0_59] : memref<512x128xf32, #tpu.memory_space<vmem>>, vector<8x16xf32>
    %cst_60 = arith.constant dense<0.000000e+00> : vector<16x16xf32>
    %160 = tpu.matmul %110, %159, %cst_60 {dimension_numbers = #tpu.dot_dimension_numbers<[1], [0], [0], [1], [0, 0, 1, 1], [], []>} : vector<16x8xf32>, vector<8x16xf32>, vector<16x16xf32> -> vector<16x16xf32>
    %161 = vector.extract_strided_slice %0 {offsets = [7, 0], sizes = [1, 16], strides = [1, 1]} : vector<24x128xf32> to vector<1x16xf32>
    %162 = vector.broadcast %161 : vector<1x16xf32> to vector<16x16xf32>
    %163 = arith.addf %160, %162 : vector<16x16xf32>
    %164 = arith.addf %158, %163 : vector<16x16xf32>
    %165 = tpu.iota {dimensions = array<i32: 0>} : vector<16x16xi32>
    %c7_i32_61 = arith.constant 7 : i32
    %166 = vector.broadcast %c7_i32_61 : i32 to vector<16x16xi32>
    %167 = arith.andi %165, %166 : vector<16x16xi32>
    %cst_62 = arith.constant 0.000000e+00 : f32
    %168 = vector.broadcast %cst_62 : f32 to vector<1x16xf32>
    %c0_i32_63 = arith.constant 0 : i32
    %169 = vector.broadcast %c0_i32_63 : i32 to vector<16x16xi32>
    %170 = arith.cmpi eq, %167, %169 : vector<16x16xi32>
    %171 = vector.extract_strided_slice %164 {offsets = [0, 0], sizes = [15, 16], strides = [1, 1]} : vector<16x16xf32> to vector<15x16xf32>
    %172 = tpu.concatenate %168, %171 in 0 : vector<1x16xf32>, vector<15x16xf32> -> vector<16x16xf32>
    %cst_64 = arith.constant 0.000000e+00 : f32
    %173 = vector.broadcast %cst_64 : f32 to vector<16x16xf32>
    %174 = arith.select %170, %173, %172 : vector<16x16xi1>, vector<16x16xf32>
    %c7_i32_65 = arith.constant 7 : i32
    %175 = vector.broadcast %c7_i32_65 : i32 to vector<16x16xi32>
    %176 = arith.cmpi eq, %167, %175 : vector<16x16xi32>
    %177 = vector.extract_strided_slice %164 {offsets = [1, 0], sizes = [15, 16], strides = [1, 1]} : vector<16x16xf32> to vector<15x16xf32>
    %178 = tpu.concatenate %177, %168 in 0 : vector<15x16xf32>, vector<1x16xf32> -> vector<16x16xf32>
    %cst_66 = arith.constant 0.000000e+00 : f32
    %179 = vector.broadcast %cst_66 : f32 to vector<16x16xf32>
    %180 = arith.select %176, %179, %178 : vector<16x16xi1>, vector<16x16xf32>
    %181 = tpu.concatenate %174, %164, %180 in 1 : vector<16x16xf32>, vector<16x16xf32>, vector<16x16xf32> -> vector<16x48xf32>
    %c192 = arith.constant 192 : index
    %c0_67 = arith.constant 0 : index
    %182 = vector.load %arg1[%c192, %c0_67] : memref<512x128xf32, #tpu.memory_space<vmem>>, vector<48x16xf32>
    %cst_68 = arith.constant dense<0.000000e+00> : vector<16x16xf32>
    %183 = tpu.matmul %181, %182, %cst_68 {dimension_numbers = #tpu.dot_dimension_numbers<[1], [0], [0], [1], [0, 0, 1, 1], [], []>} : vector<16x48xf32>, vector<48x16xf32>, vector<16x16xf32> -> vector<16x16xf32>
    %184 = vector.extract_strided_slice %0 {offsets = [8, 0], sizes = [1, 16], strides = [1, 1]} : vector<24x128xf32> to vector<1x16xf32>
    %185 = vector.broadcast %184 : vector<1x16xf32> to vector<16x16xf32>
    %186 = arith.addf %183, %185 : vector<16x16xf32>
    %cst_69 = arith.constant 0.000000e+00 : f32
    %187 = vector.broadcast %cst_69 : f32 to vector<16x16xf32>
    %188 = arith.maximumf %186, %187 : vector<16x16xf32>
    %189 = tpu.iota {dimensions = array<i32: 0>} : vector<16x16xi32>
    %c7_i32_70 = arith.constant 7 : i32
    %190 = vector.broadcast %c7_i32_70 : i32 to vector<16x16xi32>
    %191 = arith.andi %189, %190 : vector<16x16xi32>
    %cst_71 = arith.constant 0.000000e+00 : f32
    %192 = vector.broadcast %cst_71 : f32 to vector<1x16xf32>
    %c0_i32_72 = arith.constant 0 : i32
    %193 = vector.broadcast %c0_i32_72 : i32 to vector<16x16xi32>
    %194 = arith.cmpi eq, %191, %193 : vector<16x16xi32>
    %195 = vector.extract_strided_slice %188 {offsets = [0, 0], sizes = [15, 16], strides = [1, 1]} : vector<16x16xf32> to vector<15x16xf32>
    %196 = tpu.concatenate %192, %195 in 0 : vector<1x16xf32>, vector<15x16xf32> -> vector<16x16xf32>
    %cst_73 = arith.constant 0.000000e+00 : f32
    %197 = vector.broadcast %cst_73 : f32 to vector<16x16xf32>
    %198 = arith.select %194, %197, %196 : vector<16x16xi1>, vector<16x16xf32>
    %c7_i32_74 = arith.constant 7 : i32
    %199 = vector.broadcast %c7_i32_74 : i32 to vector<16x16xi32>
    %200 = arith.cmpi eq, %191, %199 : vector<16x16xi32>
    %201 = vector.extract_strided_slice %188 {offsets = [1, 0], sizes = [15, 16], strides = [1, 1]} : vector<16x16xf32> to vector<15x16xf32>
    %202 = tpu.concatenate %201, %192 in 0 : vector<15x16xf32>, vector<1x16xf32> -> vector<16x16xf32>
    %cst_75 = arith.constant 0.000000e+00 : f32
    %203 = vector.broadcast %cst_75 : f32 to vector<16x16xf32>
    %204 = arith.select %200, %203, %202 : vector<16x16xi1>, vector<16x16xf32>
    %205 = tpu.concatenate %198, %188, %204 in 1 : vector<16x16xf32>, vector<16x16xf32>, vector<16x16xf32> -> vector<16x48xf32>
    %c240 = arith.constant 240 : index
    %c0_76 = arith.constant 0 : index
    %206 = vector.load %arg1[%c240, %c0_76] : memref<512x128xf32, #tpu.memory_space<vmem>>, vector<48x16xf32>
    %cst_77 = arith.constant dense<0.000000e+00> : vector<16x16xf32>
    %207 = tpu.matmul %205, %206, %cst_77 {dimension_numbers = #tpu.dot_dimension_numbers<[1], [0], [0], [1], [0, 0, 1, 1], [], []>} : vector<16x48xf32>, vector<48x16xf32>, vector<16x16xf32> -> vector<16x16xf32>
    %208 = vector.extract_strided_slice %0 {offsets = [9, 0], sizes = [1, 16], strides = [1, 1]} : vector<24x128xf32> to vector<1x16xf32>
    %209 = vector.broadcast %208 : vector<1x16xf32> to vector<16x16xf32>
    %210 = arith.addf %207, %209 : vector<16x16xf32>
    %cst_78 = arith.constant 0.000000e+00 : f32
    %211 = vector.broadcast %cst_78 : f32 to vector<16x16xf32>
    %212 = arith.maximumf %210, %211 : vector<16x16xf32>
    %213 = arith.addf %212, %164 : vector<16x16xf32>
    %214 = vector.extract_strided_slice %213 {offsets = [1, 0], sizes = [15, 16], strides = [1, 1]} : vector<16x16xf32> to vector<15x16xf32>
    %cst_79 = arith.constant 0.000000e+00 : f32
    %215 = vector.broadcast %cst_79 : f32 to vector<1x16xf32>
    %216 = tpu.concatenate %214, %215 in 0 : vector<15x16xf32>, vector<1x16xf32> -> vector<16x16xf32>
    %217 = arith.maximumf %213, %216 : vector<16x16xf32>
    %c288 = arith.constant 288 : index
    %c0_80 = arith.constant 0 : index
    %218 = vector.load %arg1[%c288, %c0_80] : memref<512x128xf32, #tpu.memory_space<vmem>>, vector<8x16xf32>
    %cst_81 = arith.constant dense<0.000000e+00> : vector<8x16xf32>
    %219 = tpu.matmul %218, %217, %cst_81 {dimension_numbers = #tpu.dot_dimension_numbers<[1], [0], [0], [1], [0, 0, 1, 1], [], []>} : vector<8x16xf32>, vector<16x16xf32>, vector<8x16xf32> -> vector<8x16xf32>
    %220 = tpu.iota {dimensions = array<i32: 0>} : vector<8x16xi32>
    %c3_i32 = arith.constant 3 : i32
    %221 = vector.broadcast %c3_i32 : i32 to vector<8x16xi32>
    %222 = arith.andi %220, %221 : vector<8x16xi32>
    %cst_82 = arith.constant 0.000000e+00 : f32
    %223 = vector.broadcast %cst_82 : f32 to vector<1x16xf32>
    %c0_i32_83 = arith.constant 0 : i32
    %224 = vector.broadcast %c0_i32_83 : i32 to vector<8x16xi32>
    %225 = arith.cmpi eq, %222, %224 : vector<8x16xi32>
    %226 = vector.extract_strided_slice %219 {offsets = [0, 0], sizes = [7, 16], strides = [1, 1]} : vector<8x16xf32> to vector<7x16xf32>
    %227 = tpu.concatenate %223, %226 in 0 : vector<1x16xf32>, vector<7x16xf32> -> vector<8x16xf32>
    %cst_84 = arith.constant 0.000000e+00 : f32
    %228 = vector.broadcast %cst_84 : f32 to vector<8x16xf32>
    %229 = arith.select %225, %228, %227 : vector<8x16xi1>, vector<8x16xf32>
    %c3_i32_85 = arith.constant 3 : i32
    %230 = vector.broadcast %c3_i32_85 : i32 to vector<8x16xi32>
    %231 = arith.cmpi eq, %222, %230 : vector<8x16xi32>
    %232 = vector.extract_strided_slice %219 {offsets = [1, 0], sizes = [7, 16], strides = [1, 1]} : vector<8x16xf32> to vector<7x16xf32>
    %233 = tpu.concatenate %232, %223 in 0 : vector<7x16xf32>, vector<1x16xf32> -> vector<8x16xf32>
    %cst_86 = arith.constant 0.000000e+00 : f32
    %234 = vector.broadcast %cst_86 : f32 to vector<8x16xf32>
    %235 = arith.select %231, %234, %233 : vector<8x16xi1>, vector<8x16xf32>
    %236 = tpu.concatenate %229, %219, %235 in 1 : vector<8x16xf32>, vector<8x16xf32>, vector<8x16xf32> -> vector<8x48xf32>
    %c296 = arith.constant 296 : index
    %c0_87 = arith.constant 0 : index
    %237 = vector.load %arg1[%c296, %c0_87] : memref<512x128xf32, #tpu.memory_space<vmem>>, vector<48x16xf32>
    %cst_88 = arith.constant dense<0.000000e+00> : vector<8x16xf32>
    %238 = tpu.matmul %236, %237, %cst_88 {dimension_numbers = #tpu.dot_dimension_numbers<[1], [0], [0], [1], [0, 0, 1, 1], [], []>} : vector<8x48xf32>, vector<48x16xf32>, vector<8x16xf32> -> vector<8x16xf32>
    %239 = vector.extract_strided_slice %0 {offsets = [10, 0], sizes = [1, 16], strides = [1, 1]} : vector<24x128xf32> to vector<1x16xf32>
    %240 = vector.broadcast %239 : vector<1x16xf32> to vector<8x16xf32>
    %241 = arith.addf %238, %240 : vector<8x16xf32>
    %cst_89 = arith.constant 0.000000e+00 : f32
    %242 = vector.broadcast %cst_89 : f32 to vector<8x16xf32>
    %243 = arith.maximumf %241, %242 : vector<8x16xf32>
    %244 = tpu.iota {dimensions = array<i32: 0>} : vector<8x16xi32>
    %c3_i32_90 = arith.constant 3 : i32
    %245 = vector.broadcast %c3_i32_90 : i32 to vector<8x16xi32>
    %246 = arith.andi %244, %245 : vector<8x16xi32>
    %cst_91 = arith.constant 0.000000e+00 : f32
    %247 = vector.broadcast %cst_91 : f32 to vector<1x16xf32>
    %c0_i32_92 = arith.constant 0 : i32
    %248 = vector.broadcast %c0_i32_92 : i32 to vector<8x16xi32>
    %249 = arith.cmpi eq, %246, %248 : vector<8x16xi32>
    %250 = vector.extract_strided_slice %243 {offsets = [0, 0], sizes = [7, 16], strides = [1, 1]} : vector<8x16xf32> to vector<7x16xf32>
    %251 = tpu.concatenate %247, %250 in 0 : vector<1x16xf32>, vector<7x16xf32> -> vector<8x16xf32>
    %cst_93 = arith.constant 0.000000e+00 : f32
    %252 = vector.broadcast %cst_93 : f32 to vector<8x16xf32>
    %253 = arith.select %249, %252, %251 : vector<8x16xi1>, vector<8x16xf32>
    %c3_i32_94 = arith.constant 3 : i32
    %254 = vector.broadcast %c3_i32_94 : i32 to vector<8x16xi32>
    %255 = arith.cmpi eq, %246, %254 : vector<8x16xi32>
    %256 = vector.extract_strided_slice %243 {offsets = [1, 0], sizes = [7, 16], strides = [1, 1]} : vector<8x16xf32> to vector<7x16xf32>
    %257 = tpu.concatenate %256, %247 in 0 : vector<7x16xf32>, vector<1x16xf32> -> vector<8x16xf32>
    %cst_95 = arith.constant 0.000000e+00 : f32
    %258 = vector.broadcast %cst_95 : f32 to vector<8x16xf32>
    %259 = arith.select %255, %258, %257 : vector<8x16xi1>, vector<8x16xf32>
    %260 = tpu.concatenate %253, %243, %259 in 1 : vector<8x16xf32>, vector<8x16xf32>, vector<8x16xf32> -> vector<8x48xf32>
    %c344 = arith.constant 344 : index
    %c0_96 = arith.constant 0 : index
    %261 = vector.load %arg1[%c344, %c0_96] : memref<512x128xf32, #tpu.memory_space<vmem>>, vector<48x16xf32>
    %cst_97 = arith.constant dense<0.000000e+00> : vector<8x16xf32>
    %262 = tpu.matmul %260, %261, %cst_97 {dimension_numbers = #tpu.dot_dimension_numbers<[1], [0], [0], [1], [0, 0, 1, 1], [], []>} : vector<8x48xf32>, vector<48x16xf32>, vector<8x16xf32> -> vector<8x16xf32>
    %263 = vector.extract_strided_slice %0 {offsets = [11, 0], sizes = [1, 16], strides = [1, 1]} : vector<24x128xf32> to vector<1x16xf32>
    %264 = vector.broadcast %263 : vector<1x16xf32> to vector<8x16xf32>
    %265 = arith.addf %262, %264 : vector<8x16xf32>
    %cst_98 = arith.constant 0.000000e+00 : f32
    %266 = vector.broadcast %cst_98 : f32 to vector<8x16xf32>
    %267 = arith.maximumf %265, %266 : vector<8x16xf32>
    %268 = arith.addf %267, %219 : vector<8x16xf32>
    %269 = tpu.iota {dimensions = array<i32: 0>} : vector<8x16xi32>
    %c3_i32_99 = arith.constant 3 : i32
    %270 = vector.broadcast %c3_i32_99 : i32 to vector<8x16xi32>
    %271 = arith.andi %269, %270 : vector<8x16xi32>
    %cst_100 = arith.constant 0.000000e+00 : f32
    %272 = vector.broadcast %cst_100 : f32 to vector<1x16xf32>
    %c0_i32_101 = arith.constant 0 : i32
    %273 = vector.broadcast %c0_i32_101 : i32 to vector<8x16xi32>
    %274 = arith.cmpi eq, %271, %273 : vector<8x16xi32>
    %275 = vector.extract_strided_slice %268 {offsets = [0, 0], sizes = [7, 16], strides = [1, 1]} : vector<8x16xf32> to vector<7x16xf32>
    %276 = tpu.concatenate %272, %275 in 0 : vector<1x16xf32>, vector<7x16xf32> -> vector<8x16xf32>
    %cst_102 = arith.constant 0.000000e+00 : f32
    %277 = vector.broadcast %cst_102 : f32 to vector<8x16xf32>
    %278 = arith.select %274, %277, %276 : vector<8x16xi1>, vector<8x16xf32>
    %c3_i32_103 = arith.constant 3 : i32
    %279 = vector.broadcast %c3_i32_103 : i32 to vector<8x16xi32>
    %280 = arith.cmpi eq, %271, %279 : vector<8x16xi32>
    %281 = vector.extract_strided_slice %268 {offsets = [1, 0], sizes = [7, 16], strides = [1, 1]} : vector<8x16xf32> to vector<7x16xf32>
    %282 = tpu.concatenate %281, %272 in 0 : vector<7x16xf32>, vector<1x16xf32> -> vector<8x16xf32>
    %cst_104 = arith.constant 0.000000e+00 : f32
    %283 = vector.broadcast %cst_104 : f32 to vector<8x16xf32>
    %284 = arith.select %280, %283, %282 : vector<8x16xi1>, vector<8x16xf32>
    %285 = tpu.concatenate %278, %268, %284 in 1 : vector<8x16xf32>, vector<8x16xf32>, vector<8x16xf32> -> vector<8x48xf32>
    %c392 = arith.constant 392 : index
    %c0_105 = arith.constant 0 : index
    %286 = vector.load %arg1[%c392, %c0_105] : memref<512x128xf32, #tpu.memory_space<vmem>>, vector<48x16xf32>
    %cst_106 = arith.constant dense<0.000000e+00> : vector<8x16xf32>
    %287 = tpu.matmul %285, %286, %cst_106 {dimension_numbers = #tpu.dot_dimension_numbers<[1], [0], [0], [1], [0, 0, 1, 1], [], []>} : vector<8x48xf32>, vector<48x16xf32>, vector<8x16xf32> -> vector<8x16xf32>
    %288 = vector.extract_strided_slice %0 {offsets = [12, 0], sizes = [1, 16], strides = [1, 1]} : vector<24x128xf32> to vector<1x16xf32>
    %289 = vector.broadcast %288 : vector<1x16xf32> to vector<8x16xf32>
    %290 = arith.addf %287, %289 : vector<8x16xf32>
    %cst_107 = arith.constant 0.000000e+00 : f32
    %291 = vector.broadcast %cst_107 : f32 to vector<8x16xf32>
    %292 = arith.maximumf %290, %291 : vector<8x16xf32>
    %293 = tpu.iota {dimensions = array<i32: 0>} : vector<8x16xi32>
    %c3_i32_108 = arith.constant 3 : i32
    %294 = vector.broadcast %c3_i32_108 : i32 to vector<8x16xi32>
    %295 = arith.andi %293, %294 : vector<8x16xi32>
    %cst_109 = arith.constant 0.000000e+00 : f32
    %296 = vector.broadcast %cst_109 : f32 to vector<1x16xf32>
    %c0_i32_110 = arith.constant 0 : i32
    %297 = vector.broadcast %c0_i32_110 : i32 to vector<8x16xi32>
    %298 = arith.cmpi eq, %295, %297 : vector<8x16xi32>
    %299 = vector.extract_strided_slice %292 {offsets = [0, 0], sizes = [7, 16], strides = [1, 1]} : vector<8x16xf32> to vector<7x16xf32>
    %300 = tpu.concatenate %296, %299 in 0 : vector<1x16xf32>, vector<7x16xf32> -> vector<8x16xf32>
    %cst_111 = arith.constant 0.000000e+00 : f32
    %301 = vector.broadcast %cst_111 : f32 to vector<8x16xf32>
    %302 = arith.select %298, %301, %300 : vector<8x16xi1>, vector<8x16xf32>
    %c3_i32_112 = arith.constant 3 : i32
    %303 = vector.broadcast %c3_i32_112 : i32 to vector<8x16xi32>
    %304 = arith.cmpi eq, %295, %303 : vector<8x16xi32>
    %305 = vector.extract_strided_slice %292 {offsets = [1, 0], sizes = [7, 16], strides = [1, 1]} : vector<8x16xf32> to vector<7x16xf32>
    %306 = tpu.concatenate %305, %296 in 0 : vector<7x16xf32>, vector<1x16xf32> -> vector<8x16xf32>
    %cst_113 = arith.constant 0.000000e+00 : f32
    %307 = vector.broadcast %cst_113 : f32 to vector<8x16xf32>
    %308 = arith.select %304, %307, %306 : vector<8x16xi1>, vector<8x16xf32>
    %309 = tpu.concatenate %302, %292, %308 in 1 : vector<8x16xf32>, vector<8x16xf32>, vector<8x16xf32> -> vector<8x48xf32>
    %c440 = arith.constant 440 : index
    %c0_114 = arith.constant 0 : index
    %310 = vector.load %arg1[%c440, %c0_114] : memref<512x128xf32, #tpu.memory_space<vmem>>, vector<48x16xf32>
    %cst_115 = arith.constant dense<0.000000e+00> : vector<8x16xf32>
    %311 = tpu.matmul %309, %310, %cst_115 {dimension_numbers = #tpu.dot_dimension_numbers<[1], [0], [0], [1], [0, 0, 1, 1], [], []>} : vector<8x48xf32>, vector<48x16xf32>, vector<8x16xf32> -> vector<8x16xf32>
    %312 = vector.extract_strided_slice %0 {offsets = [13, 0], sizes = [1, 16], strides = [1, 1]} : vector<24x128xf32> to vector<1x16xf32>
    %313 = vector.broadcast %312 : vector<1x16xf32> to vector<8x16xf32>
    %314 = arith.addf %311, %313 : vector<8x16xf32>
    %cst_116 = arith.constant 0.000000e+00 : f32
    %315 = vector.broadcast %cst_116 : f32 to vector<8x16xf32>
    %316 = arith.maximumf %314, %315 : vector<8x16xf32>
    %317 = arith.addf %316, %268 : vector<8x16xf32>
    %318 = vector.extract_strided_slice %317 {offsets = [3, 0], sizes = [1, 16], strides = [1, 1]} : vector<8x16xf32> to vector<1x16xf32>
    %319 = vector.extract_strided_slice %317 {offsets = [7, 0], sizes = [1, 16], strides = [1, 1]} : vector<8x16xf32> to vector<1x16xf32>
    %320 = tpu.concatenate %318, %319 in 0 : vector<1x16xf32>, vector<1x16xf32> -> vector<2x16xf32>
    %c488 = arith.constant 488 : index
    %c0_117 = arith.constant 0 : index
    %321 = vector.load %arg1[%c488, %c0_117] : memref<512x128xf32, #tpu.memory_space<vmem>>, vector<16x8xf32>
    %cst_118 = arith.constant dense<0.000000e+00> : vector<2x8xf32>
    %322 = tpu.matmul %320, %321, %cst_118 {dimension_numbers = #tpu.dot_dimension_numbers<[1], [0], [0], [1], [0, 0, 1, 1], [], []>} : vector<2x16xf32>, vector<16x8xf32>, vector<2x8xf32> -> vector<2x8xf32>
    %323 = vector.extract_strided_slice %0 {offsets = [14, 0], sizes = [1, 8], strides = [1, 1]} : vector<24x128xf32> to vector<1x8xf32>
    %324 = vector.broadcast %323 : vector<1x8xf32> to vector<2x8xf32>
    %325 = arith.addf %322, %324 : vector<2x8xf32>
    %cst_119 = arith.constant 0.000000e+00 : f32
    %326 = vector.broadcast %cst_119 : f32 to vector<2x8xf32>
    %327 = arith.maximumf %325, %326 : vector<2x8xf32>
    %328 = arith.mulf %327, %327 : vector<2x8xf32>
    %cst_120 = arith.constant dense<0.000000e+00> : vector<2xf32>
    %329 = vector.multi_reduction <add>, %328, %cst_120 [1] : vector<2x8xf32> to vector<2xf32>
    %330 = vector.shape_cast %329 : vector<2xf32> to vector<2x1xf32>
    %331 = math.sqrt %330 : vector<2x1xf32>
    %cst_121 = arith.constant 9.99999996E-13 : f32
    %332 = vector.broadcast %cst_121 : f32 to vector<2x1xf32>
    %333 = arith.maximumf %331, %332 : vector<2x1xf32>
    %334 = vector.broadcast %333 : vector<2x1xf32> to vector<2x8xf32>
    %335 = arith.divf %327, %334 : vector<2x8xf32>
    %cst_122 = arith.constant 0.000000e+00 : f32
    %336 = vector.broadcast %cst_122 : f32 to vector<2x8xf32>
    %337 = arith.maximumf %335, %336 : vector<2x8xf32>
    %cst_123 = arith.constant dense<0.000000e+00> : vector<8xf32>
    %338 = vector.multi_reduction <add>, %337, %cst_123 [0] : vector<2x8xf32> to vector<8xf32>
    %339 = vector.shape_cast %338 : vector<8xf32> to vector<1x8xf32>
    %cst_124 = arith.constant 2.000000e+00 : f32
    %340 = vector.broadcast %cst_124 : f32 to vector<1x8xf32>
    %341 = arith.divf %339, %340 : vector<1x8xf32>
    %342 = vector.broadcast %341 : vector<1x8xf32> to vector<2x8xf32>
    %343 = arith.subf %337, %342 : vector<2x8xf32>
    %344 = arith.mulf %343, %343 : vector<2x8xf32>
    %cst_125 = arith.constant dense<0.000000e+00> : vector<8xf32>
    %345 = vector.multi_reduction <add>, %344, %cst_125 [0] : vector<2x8xf32> to vector<8xf32>
    %346 = vector.shape_cast %345 : vector<8xf32> to vector<1x8xf32>
    %cst_126 = arith.constant 2.000000e+00 : f32
    %347 = vector.broadcast %cst_126 : f32 to vector<1x8xf32>
    %348 = arith.divf %346, %347 : vector<1x8xf32>
    %349 = vector.broadcast %341 : vector<1x8xf32> to vector<2x8xf32>
    %350 = arith.subf %337, %349 : vector<2x8xf32>
    %cst_127 = arith.constant 9.99999974E-6 : f32
    %351 = vector.broadcast %cst_127 : f32 to vector<1x8xf32>
    %352 = arith.addf %348, %351 : vector<1x8xf32>
    %353 = math.rsqrt %352 : vector<1x8xf32>
    %354 = vector.broadcast %353 : vector<1x8xf32> to vector<2x8xf32>
    %355 = arith.mulf %350, %354 : vector<2x8xf32>
    %356 = vector.extract_strided_slice %0 {offsets = [15, 0], sizes = [1, 8], strides = [1, 1]} : vector<24x128xf32> to vector<1x8xf32>
    %357 = vector.broadcast %356 : vector<1x8xf32> to vector<2x8xf32>
    %358 = arith.mulf %355, %357 : vector<2x8xf32>
    %359 = vector.extract_strided_slice %0 {offsets = [16, 0], sizes = [1, 8], strides = [1, 1]} : vector<24x128xf32> to vector<1x8xf32>
    %360 = vector.broadcast %359 : vector<1x8xf32> to vector<2x8xf32>
    %361 = arith.addf %358, %360 : vector<2x8xf32>
    %c504 = arith.constant 504 : index
    %c0_128 = arith.constant 0 : index
    %362 = vector.load %arg1[%c504, %c0_128] : memref<512x128xf32, #tpu.memory_space<vmem>>, vector<8x5xf32>
    %cst_129 = arith.constant dense<0.000000e+00> : vector<2x5xf32>
    %363 = tpu.matmul %361, %362, %cst_129 {dimension_numbers = #tpu.dot_dimension_numbers<[1], [0], [0], [1], [0, 0, 1, 1], [], []>} : vector<2x8xf32>, vector<8x5xf32>, vector<2x5xf32> -> vector<2x5xf32>
    %364 = vector.extract_strided_slice %0 {offsets = [17, 0], sizes = [1, 5], strides = [1, 1]} : vector<24x128xf32> to vector<1x5xf32>
    %365 = vector.broadcast %364 : vector<1x5xf32> to vector<2x5xf32>
    %366 = arith.addf %363, %365 : vector<2x5xf32>
    %cst_130 = arith.constant 0.000000e+00 : f32
    %367 = vector.broadcast %cst_130 : f32 to vector<2x128xf32>
    %c0_131 = arith.constant 0 : index
    %c0_132 = arith.constant 0 : index
    %368 = vector.load %arg3[%c0_131, %c0_132] : memref<2x128xf32, #tpu.memory_space<vmem>>, vector<2x128xf32>
    tpu.vector_store %arg3[%c0_131, %c0_132], %367 {strides = array<i32>} : memref<2x128xf32, #tpu.memory_space<vmem>>, vector<2x128xf32>,
    %c0_133 = arith.constant 0 : index
    %c0_134 = arith.constant 0 : index
    %369 = vector.load %arg3[%c0_133, %c0_134] : memref<2x128xf32, #tpu.memory_space<vmem>>, vector<2x8xf32>
    tpu.vector_store %arg3[%c0_133, %c0_134], %335 {strides = array<i32>} : memref<2x128xf32, #tpu.memory_space<vmem>>, vector<2x8xf32>,
    %c0_135 = arith.constant 0 : index
    %c8 = arith.constant 8 : index
    %370 = vector.load %arg3[%c0_135, %c8] : memref<2x128xf32, #tpu.memory_space<vmem>>, vector<2x5xf32>
    tpu.vector_store %arg3[%c0_135, %c8], %366 {strides = array<i32>} : memref<2x128xf32, #tpu.memory_space<vmem>>, vector<2x5xf32>,
    return
  }
}

</mosaic_0001>

<llo_original>
// kernel: _lambda_.1
$region0: #{_lambda_.1}
  #allocation0 [shape = 'u32[]', space=smem, size = 0x4, offset = 0x4, fixed_abs, tag = 'smem constant byte address 0x4 - core index']
  #allocation1 [shape = 'u32[144,128]{1,0:T(1,128)}', space=vmem, size = 0x12000, scoped, tag = 'internal scratch']
  %s0 = inlined_call_operand.vmem [shape: f32[32,4], index: 0, kind: input, shape index: {}]
  %s1 = inlined_call_operand.hbm [shape: f32[512,128], index: 1, kind: input, shape index: {}]
  %s2 = inlined_call_operand.vmem [shape: f32[24,128], index: 2, kind: input, shape index: {}]
  %s3 = inlined_call_operand.vmem [shape: f32[2,128], index: 3, kind: output, shape index: {}]
  %s4 = sld [smem:[#allocation0]]
  $region26: #{_lambda_.1} parent=0
    _
  %s6 = ssub.s32 1, %s4
  %s7 = scalar_select 0, %s6, %s4
  $region1: #{_lambda_.1} parent=0
    #allocation2 [shape = 'u8[262144]{0}', space=vmem, size = 0x40000, scoped, tag = 'input window, operand 1, single buffered']
    #allocation3 [shape = 's32[1]{0}', space=sflag, size = 0x4, scoped, tag = 'scoped memory for _lambda_.1']
    %8 = vsyncpa [#allocation3], 0
    // Predicated region
    $region2: #{_lambda_.1} parent=1 // pred_check
      _
    $region3: #{_lambda_.1} parent=1 // pred_check_branch
      %10 = sbr.rel (0) target = $region5
    $region4: #{_lambda_.1} parent=1 // pred_region
      _
    $region5: #{_lambda_.1} parent=1 // pred_fallthru
      _
    // Predicated region
    $region6: #{_lambda_.1} parent=1 // pred_check
      _
    $region7: #{_lambda_.1} parent=1 // pred_check_branch
      %12 = sbr.rel (0) target = $region9
    $region8: #{_lambda_.1} parent=1 // pred_region
      %s14 = ssub.s32 8192, 8192
      %15 = vsyncadd [#allocation3], %s14
      %s16 = sshll.u32 [#allocation2], 4
      %s17 = int_to_ptr.vmem [resolvable:$true] %s16
      %22 = dma.hbm_to_vmem [thread:$0]  %s1, 8192, %s17, [#allocation3], 128, 128, 8
    $region9: #{_lambda_.1} parent=1 // pred_fallthru
      _
    // Predicated region
    $region10: #{_lambda_.1} parent=1 // pred_check
      _
    $region11: #{_lambda_.1} parent=1 // pred_check_branch
      %24 = sbr.rel (0) target = $region13
    $region12: #{_lambda_.1} parent=1 // pred_region
      _
    $region13: #{_lambda_.1} parent=1 // pred_fallthru
      _
    // Predicated region
    $region14: #{_lambda_.1} parent=1 // pred_check
      _
    $region15: #{_lambda_.1} parent=1 // pred_check_branch
      %26 = sbr.rel (0) target = $region17
    $region16: #{_lambda_.1} parent=1 // pred_region
      %27 = dma.done [#allocation3], 8192
    $region17: #{_lambda_.1} parent=1 // pred_fallthru
      _
    %v28 = vld [vmem:[%s2] sm:$0xff]
    %v29 = vld [vmem:[%s2 + $0x8] sm:$0xff]
    %v30 = vld [vmem:[%s2 + $0x10] sm:$0xff]
    %v31 = vld [vmem:[%s0] sm:$0xff]
    %v32 = vld [vmem:[%s0 + $0x8] sm:$0xff]
    %v33 = vld [vmem:[%s0 + $0x10] sm:$0xff]
    %v34 = vld [vmem:[%s0 + $0x18] sm:$0xff]
    %v35 = vlaneseq
    %v36 = vshrl.u32 %v35, 7
    %v37 = vadd.s32 %v36, 8
    %v38 = vadd.s32 %v36, 16
    %v39 = vadd.s32 %v36, 24
    %v40 = vand.u32 %v36, 15
    %v41 = vand.u32 %v37, 15
    %v42 = vand.u32 %v38, 15
    %v43 = vand.u32 %v39, 15
    %vm44 = vcmp.eq.s32.totalorder %v40, 0
    %vm45 = vcmp.eq.s32.totalorder %v41, 0
    %vm46 = vcmp.eq.s32.totalorder %v42, 0
    %vm47 = vcmp.eq.s32.totalorder %v43, 0
    %vm52 = vcmask 1040384
    %v53 = vrot.slane %v31, 7
    %v54 = vrot.slane %v32, 7
    %v55 = vsel %vm52, %v53, %v54
    %v56 = vrot.slane %v33, 7
    %v57 = vsel %vm52, %v54, %v56
    %v58 = vrot.slane %v34, 7
    %v59 = vsel %vm52, %v56, %v58
    %v64 = vsel %vm52, 0.0, %v53
    %v65 = vsel %vm44, 0.0, %v64
    %v66 = vsel %vm45, 0.0, %v55
    %v67 = vsel %vm46, 0.0, %v57
    %v68 = vsel %vm47, 0.0, %v59
    %vm69 = vcmp.eq.s32.totalorder %v40, 15
    %vm70 = vcmp.eq.s32.totalorder %v41, 15
    %vm71 = vcmp.eq.s32.totalorder %v42, 15
    %vm72 = vcmp.eq.s32.totalorder %v43, 15
    %vm73 = vcmask 1046528
    %v74 = vrot.slane %v31, 1
    %v75 = vrot.slane %v32, 1
    %v76 = vsel %vm73, %v74, %v75
    %v77 = vrot.slane %v33, 1
    %v78 = vsel %vm73, %v75, %v77
    %v79 = vrot.slane %v34, 1
    %v80 = vsel %vm73, %v77, %v79
    %v85 = vsel %vm73, %v79, 0.0
    %v86 = vsel %vm69, 0.0, %v76
    %v87 = vsel %vm70, 0.0, %v78
    %v88 = vsel %vm71, 0.0, %v80
    %v89 = vsel %vm72, 0.0, %v85
    %90 = vrot.lane.b32.xlu0 %v31, 4
    %v91 = vpop.permute.xlu0 %90
    %92 = vrot.lane.b32.xlu0 %v32, 4
    %v93 = vpop.permute.xlu0 %92
    %94 = vrot.lane.b32.xlu0 %v33, 4
    %v95 = vpop.permute.xlu0 %94
    %96 = vrot.lane.b32.xlu0 %v34, 4
    %v97 = vpop.permute.xlu0 %96
    %106 = vrot.lane.b32.xlu0 %v86, 8
    %v107 = vpop.permute.xlu0 %106
    %108 = vrot.lane.b32.xlu0 %v87, 8
    %v109 = vpop.permute.xlu0 %108
    %110 = vrot.lane.b32.xlu0 %v88, 8
    %v111 = vpop.permute.xlu0 %110
    %112 = vrot.lane.b32.xlu0 %v89, 8
    %v113 = vpop.permute.xlu0 %112
    %vm118 = vcmask 31744
    %v119 = vsel %vm118, %v65, %v91
    %v120 = vsel %vm118, %v66, %v93
    %v121 = vsel %vm118, %v67, %v95
    %v122 = vsel %vm118, %v68, %v97
    %vm123 = vcmask 64512
    %v124 = vsel %vm123, %v119, %v107
    %v125 = vsel %vm123, %v120, %v109
    %v126 = vsel %vm123, %v121, %v111
    %v127 = vsel %vm123, %v122, %v113
    %v128 = vld [vmem:[#allocation2] sm:$0xff]
    %v129 = vld [vmem:[#allocation2 + $0x8] sm:$0xf]
    %v130 = vlaneseq
    %v131 = vshrl.u32 %v130, 7
    %v132 = vsub.s32 0, %v131
    %v133 = vrot.slane %v28, %v132
    %vm134 = vcmask 97280
    %v136 = vsel %vm134, %v124, 0
    %v139 = vsel %vm134, %v125, 0
    %v142 = vsel %vm134, %v126, 0
    %v145 = vsel %vm134, %v127, 0
    %vm147 = vcmask 1043456
    %v149 = vsel %vm147, %v129, 0
    %151 = vmatprep.subr.mxu0 0.0
    %152 = vmatpush1.msra.mxu0 %v128
    %153 = vmatprep.subr.mxu0 0.0
    %154 = vmatpush1.msra.mxu0 %v149
    %155 = vmatprep.subr.mxu0 0.0
    %156 = vmatpush1.msra.mxu0 0.0
    %157 = vmatprep.subr.mxu0 0.0
    %158 = vmatpush1.msra.mxu0 0.0
    %159 = vmatprep.subr.mxu0 0.0
    %160 = vmatpush1.msra.mxu0 0.0
    %161 = vmatprep.subr.mxu0 0.0
    %162 = vmatpush1.msra.mxu0 0.0
    %163 = vmatprep.subr.mxu0 0.0
    %164 = vmatpush1.msra.mxu0 0.0
    %165 = vmatprep.subr.mxu0 0.0
    %166 = vmatpush1.msra.mxu0 0.0
    %167 = vmatprep.subr.mxu0 0.0
    %168 = vmatpush1.msra.mxu0 0.0
    %169 = vmatprep.subr.mxu0 0.0
    %170 = vmatpush1.msra.mxu0 0.0
    %171 = vmatprep.subr.mxu0 0.0
    %172 = vmatpush1.msra.mxu0 0.0
    %173 = vmatprep.subr.mxu0 0.0
    %174 = vmatpush1.msra.mxu0 0.0
    %175 = vmatprep.subr.mxu0 0.0
    %176 = vmatpush1.msra.mxu0 0.0
    %177 = vmatprep.subr.mxu0 0.0
    %178 = vmatpush1.msra.mxu0 0.0
    %179 = vmatprep.subr.mxu0 0.0
    %180 = vmatpush1.msra.mxu0 0.0
    %181 = vmatprep.subr.mxu0 0.0
    %182 = vmatpush1.msra.mxu0 0.0
    %183 = vmatprep.subr.mxu0 0.0
    %184 = vmatpush1.msra.mxu0 0.0
    %185 = vmatprep.subr.mxu0 0.0
    %186 = vmatpush1.msra.mxu0 0.0
    %187 = vmatprep.subr.mxu0 0.0
    %188 = vmatpush1.msra.mxu0 0.0
    %189 = vmatprep.subr.mxu0 0.0
    %190 = vmatpush1.msra.mxu0 0.0
    %191 = vmatprep.subr.mxu0 0.0
    %192 = vmatpush1.msra.mxu0 0.0
    %193 = vmatprep.subr.mxu0 0.0
    %194 = vmatpush1.msra.mxu0 0.0
    %195 = vmatprep.subr.mxu0 0.0
    %196 = vmatpush1.msra.mxu0 0.0
    %197 = vmatprep.subr.mxu0 0.0
    %198 = vmatpush1.msra.mxu0 0.0
    %199 = vmatprep.subr.mxu0 0.0
    %200 = vmatpush1.msra.mxu0 0.0
    %201 = vmatprep.subr.mxu0 0.0
    %202 = vmatpush1.msra.mxu0 0.0
    %203 = vmatprep.subr.mxu0 0.0
    %204 = vmatpush1.msra.mxu0 0.0
    %205 = vmatprep.subr.mxu0 0.0
    %206 = vmatpush1.msra.mxu0 0.0
    %207 = vmatprep.subr.mxu0 0.0
    %208 = vmatpush1.msra.mxu0 0.0
    %209 = vmatprep.subr.mxu0 0.0
    %210 = vmatpush1.msra.mxu0 0.0
    %211 = vmatprep.subr.mxu0 0.0
    %212 = vmatpush1.msra.mxu0 0.0
    %213 = vmatprep.subr.mxu0 0.0
    %214 = vmatpush1.msra.mxu0 0.0
    %215 = vmatprep.mubr.f32.mxu0 0.0
    %216 = vmatmul.mubr.f32.gmra.mrb[0].mxu0 %v136
    %v217 = vpop.f32.mrb[0].mxu0
    %v218 = vadd.f32 %v133, %v217
    %v219 = vpop.f32.mrb[0].mxu0
    %220 = vmatprep.mubr.f32.mxu0 0.0
    %221 = vmatmul.mubr.f32.gmra.mrb[0].mxu0 %v139
    %v222 = vpop.f32.mrb[0].mxu0
    %v223 = vadd.f32 %v133, %v222
    %v224 = vpop.f32.mrb[0].mxu0
    %225 = vmatprep.mubr.f32.mxu0 0.0
    %226 = vmatmul.mubr.f32.gmra.mrb[0].mxu0 %v142
    %v227 = vpop.f32.mrb[0].mxu0
    %v228 = vadd.f32 %v133, %v227
    %v229 = vpop.f32.mrb[0].mxu0
    %230 = vmatprep.mubr.f32.mxu0 0.0
    %231 = vmatmul.mubr.f32.gmra.mrb[0].mxu0 %v145
    %v232 = vpop.f32.mrb[0].mxu0
    %v233 = vadd.f32 %v133, %v232
    %v234 = vpop.f32.mrb[0].mxu0
    %235 = vdwg.mxu0
    %v236 = vmax.f32 %v218, 0.0
    %v237 = vmax.f32 %v223, 0.0
    %v238 = vmax.f32 %v228, 0.0
    %v239 = vmax.f32 %v233, 0.0
    %v244 = vrot.slane %v236, 7
    %v245 = vrot.slane %v237, 7
    %v246 = vsel %vm52, %v244, %v245
    %v247 = vrot.slane %v238, 7
    %v248 = vsel %vm52, %v245, %v247
    %v249 = vrot.slane %v239, 7
    %v250 = vsel %vm52, %v247, %v249
    %v255 = vsel %vm52, 0.0, %v244
    %v256 = vsel %vm44, 0.0, %v255
    %v257 = vsel %vm45, 0.0, %v246
    %v258 = vsel %vm46, 0.0, %v248
    %v259 = vsel %vm47, 0.0, %v250
    %v260 = vrot.slane %v236, 1
    %v261 = vrot.slane %v237, 1
    %v262 = vsel %vm73, %v260, %v261
    %v263 = vrot.slane %v238, 1
    %v264 = vsel %vm73, %v261, %v263
    %v265 = vrot.slane %v239, 1
    %v266 = vsel %vm73, %v263, %v265
    %v271 = vsel %vm73, %v265, 0.0
    %v272 = vsel %vm69, 0.0, %v262
    %v273 = vsel %vm70, 0.0, %v264
    %v274 = vsel %vm71, 0.0, %v266
    %v275 = vsel %vm72, 0.0, %v271
    %276 = vrot.lane.b32.xlu0 %v236, 8
    %v277 = vpop.permute.xlu0 %276
    %278 = vrot.lane.b32.xlu0 %v237, 8
    %v279 = vpop.permute.xlu0 %278
    %280 = vrot.lane.b32.xlu0 %v238, 8
    %v281 = vpop.permute.xlu0 %280
    %282 = vrot.lane.b32.xlu0 %v239, 8
    %v283 = vpop.permute.xlu0 %282
    %292 = vrot.lane.b32.xlu0 %v272, 16
    %v293 = vpop.permute.xlu0 %292
    %294 = vrot.lane.b32.xlu0 %v273, 16
    %v295 = vpop.permute.xlu0 %294
    %296 = vrot.lane.b32.xlu0 %v274, 16
    %v297 = vpop.permute.xlu0 %296
    %298 = vrot.lane.b32.xlu0 %v275, 16
    %v299 = vpop.permute.xlu0 %298
    %v304 = vsel %vm123, %v256, %v277
    %v305 = vsel %vm123, %v257, %v279
    %v306 = vsel %vm123, %v258, %v281
    %v307 = vsel %vm123, %v259, %v283
    %vm308 = vcmask 130048
    %v309 = vsel %vm308, %v304, %v293
    %v310 = vsel %vm308, %v305, %v295
    %v311 = vsel %vm308, %v306, %v297
    %v312 = vsel %vm308, %v307, %v299
    %v313 = vld [vmem:[#allocation2 + $0x10] sm:$0xff]
    %v314 = vld [vmem:[#allocation2 + $0x18] sm:$0xff]
    %v315 = vld [vmem:[#allocation2 + $0x20] sm:$0xff]
    %v316 = vlaneseq
    %v317 = vshrl.u32 %v316, 7
    %v318 = vsub.s32 1, %v317
    %v319 = vrot.slane %v28, %v318
    %vm320 = vcmask 195584
    %v322 = vsel %vm320, %v309, 0
    %v325 = vsel %vm320, %v310, 0
    %v328 = vsel %vm320, %v311, 0
    %v331 = vsel %vm320, %v312, 0
    %333 = vmatprep.subr.mxu0 0.0
    %334 = vmatpush1.msra.mxu0 %v313
    %335 = vmatprep.subr.mxu0 0.0
    %336 = vmatpush1.msra.mxu0 %v314
    %337 = vmatprep.subr.mxu0 0.0
    %338 = vmatpush1.msra.mxu0 %v315
    %339 = vmatprep.subr.mxu0 0.0
    %340 = vmatpush1.msra.mxu0 0.0
    %341 = vmatprep.subr.mxu0 0.0
    %342 = vmatpush1.msra.mxu0 0.0
    %343 = vmatprep.subr.mxu0 0.0
    %344 = vmatpush1.msra.mxu0 0.0
    %345 = vmatprep.subr.mxu0 0.0
    %346 = vmatpush1.msra.mxu0 0.0
    %347 = vmatprep.subr.mxu0 0.0
    %348 = vmatpush1.msra.mxu0 0.0
    %349 = vmatprep.subr.mxu0 0.0
    %350 = vmatpush1.msra.mxu0 0.0
    %351 = vmatprep.subr.mxu0 0.0
    %352 = vmatpush1.msra.mxu0 0.0
    %353 = vmatprep.subr.mxu0 0.0
    %354 = vmatpush1.msra.mxu0 0.0
    %355 = vmatprep.subr.mxu0 0.0
    %356 = vmatpush1.msra.mxu0 0.0
    %357 = vmatprep.subr.mxu0 0.0
    %358 = vmatpush1.msra.mxu0 0.0
    %359 = vmatprep.subr.mxu0 0.0
    %360 = vmatpush1.msra.mxu0 0.0
    %361 = vmatprep.subr.mxu0 0.0
    %362 = vmatpush1.msra.mxu0 0.0
    %363 = vmatprep.subr.mxu0 0.0
    %364 = vmatpush1.msra.mxu0 0.0
    %365 = vmatprep.subr.mxu0 0.0
    %366 = vmatpush1.msra.mxu0 0.0
    %367 = vmatprep.subr.mxu0 0.0
    %368 = vmatpush1.msra.mxu0 0.0
    %369 = vmatprep.subr.mxu0 0.0
    %370 = vmatpush1.msra.mxu0 0.0
    %371 = vmatprep.subr.mxu0 0.0
    %372 = vmatpush1.msra.mxu0 0.0
    %373 = vmatprep.subr.mxu0 0.0
    %374 = vmatpush1.msra.mxu0 0.0
    %375 = vmatprep.subr.mxu0 0.0
    %376 = vmatpush1.msra.mxu0 0.0
    %377 = vmatprep.subr.mxu0 0.0
    %378 = vmatpush1.msra.mxu0 0.0
    %379 = vmatprep.subr.mxu0 0.0
    %380 = vmatpush1.msra.mxu0 0.0
    %381 = vmatprep.subr.mxu0 0.0
    %382 = vmatpush1.msra.mxu0 0.0
    %383 = vmatprep.subr.mxu0 0.0
    %384 = vmatpush1.msra.mxu0 0.0
    %385 = vmatprep.subr.mxu0 0.0
    %386 = vmatpush1.msra.mxu0 0.0
    %387 = vmatprep.subr.mxu0 0.0
    %388 = vmatpush1.msra.mxu0 0.0
    %389 = vmatprep.subr.mxu0 0.0
    %390 = vmatpush1.msra.mxu0 0.0
    %391 = vmatprep.subr.mxu0 0.0
    %392 = vmatpush1.msra.mxu0 0.0
    %393 = vmatprep.subr.mxu0 0.0
    %394 = vmatpush1.msra.mxu0 0.0
    %395 = vmatprep.subr.mxu0 0.0
    %396 = vmatpush1.msra.mxu0 0.0
    %397 = vmatprep.mubr.f32.mxu0 0.0
    %398 = vmatmul.mubr.f32.gmra.mrb[0].mxu0 %v322
    %v399 = vpop.f32.mrb[0].mxu0
    %v400 = vadd.f32 %v319, %v399
    %v401 = vpop.f32.mrb[0].mxu0
    %402 = vmatprep.mubr.f32.mxu0 0.0
    %403 = vmatmul.mubr.f32.gmra.mrb[0].mxu0 %v325
    %v404 = vpop.f32.mrb[0].mxu0
    %v405 = vadd.f32 %v319, %v404
    %v406 = vpop.f32.mrb[0].mxu0
    %407 = vmatprep.mubr.f32.mxu0 0.0
    %408 = vmatmul.mubr.f32.gmra.mrb[0].mxu0 %v328
    %v409 = vpop.f32.mrb[0].mxu0
    %v410 = vadd.f32 %v319, %v409
    %v411 = vpop.f32.mrb[0].mxu0
    %412 = vmatprep.mubr.f32.mxu0 0.0
    %413 = vmatmul.mubr.f32.gmra.mrb[0].mxu0 %v331
    %v414 = vpop.f32.mrb[0].mxu0
    %v415 = vadd.f32 %v319, %v414
    %v416 = vpop.f32.mrb[0].mxu0
    %417 = vdwg.mxu0
    %v418 = vmax.f32 %v400, 0.0
    %v419 = vmax.f32 %v405, 0.0
    %v420 = vmax.f32 %v410, 0.0
    %v421 = vmax.f32 %v415, 0.0
    %v422 = vld [vmem:[#allocation2 + $0x28] sm:$0xf]
    %v423 = vlaneseq
    %v424 = vshrl.u32 %v423, 7
    %v425 = vsub.s32 2, %v424
    %v426 = vrot.slane %v28, %v425
    %v427 = vsel %vm118, %v31, 0
    %v429 = vsel %vm118, %v32, 0
    %v431 = vsel %vm118, %v33, 0
    %v433 = vsel %vm118, %v34, 0
    %v436 = vsel %vm147, %v422, 0
    %438 = vmatprep.subr.mxu0 0.0
    %439 = vmatpush1.msra.mxu0 %v436
    %440 = vmatprep.subr.mxu0 0.0
    %441 = vmatpush1.msra.mxu0 0.0
    %442 = vmatprep.subr.mxu0 0.0
    %443 = vmatpush1.msra.mxu0 0.0
    %444 = vmatprep.subr.mxu0 0.0
    %445 = vmatpush1.msra.mxu0 0.0
    %446 = vmatprep.subr.mxu0 0.0
    %447 = vmatpush1.msra.mxu0 0.0
    %448 = vmatprep.subr.mxu0 0.0
    %449 = vmatpush1.msra.mxu0 0.0
    %450 = vmatprep.subr.mxu0 0.0
    %451 = vmatpush1.msra.mxu0 0.0
    %452 = vmatprep.subr.mxu0 0.0
    %453 = vmatpush1.msra.mxu0 0.0
    %454 = vmatprep.subr.mxu0 0.0
    %455 = vmatpush1.msra.mxu0 0.0
    %456 = vmatprep.subr.mxu0 0.0
    %457 = vmatpush1.msra.mxu0 0.0
    %458 = vmatprep.subr.mxu0 0.0
    %459 = vmatpush1.msra.mxu0 0.0
    %460 = vmatprep.subr.mxu0 0.0
    %461 = vmatpush1.msra.mxu0 0.0
    %462 = vmatprep.subr.mxu0 0.0
    %463 = vmatpush1.msra.mxu0 0.0
    %464 = vmatprep.subr.mxu0 0.0
    %465 = vmatpush1.msra.mxu0 0.0
    %466 = vmatprep.subr.mxu0 0.0
    %467 = vmatpush1.msra.mxu0 0.0
    %468 = vmatprep.subr.mxu0 0.0
    %469 = vmatpush1.msra.mxu0 0.0
    %470 = vmatprep.subr.mxu0 0.0
    %471 = vmatpush1.msra.mxu0 0.0
    %472 = vmatprep.subr.mxu0 0.0
    %473 = vmatpush1.msra.mxu0 0.0
    %474 = vmatprep.subr.mxu0 0.0
    %475 = vmatpush1.msra.mxu0 0.0
    %476 = vmatprep.subr.mxu0 0.0
    %477 = vmatpush1.msra.mxu0 0.0
    %478 = vmatprep.subr.mxu0 0.0
    %479 = vmatpush1.msra.mxu0 0.0
    %480 = vmatprep.subr.mxu0 0.0
    %481 = vmatpush1.msra.mxu0 0.0
    %482 = vmatprep.subr.mxu0 0.0
    %483 = vmatpush1.msra.mxu0 0.0
    %484 = vmatprep.subr.mxu0 0.0
    %485 = vmatpush1.msra.mxu0 0.0
    %486 = vmatprep.subr.mxu0 0.0
    %487 = vmatpush1.msra.mxu0 0.0
    %488 = vmatprep.subr.mxu0 0.0
    %489 = vmatpush1.msra.mxu0 0.0
    %490 = vmatprep.subr.mxu0 0.0
    %491 = vmatpush1.msra.mxu0 0.0
    %492 = vmatprep.subr.mxu0 0.0
    %493 = vmatpush1.msra.mxu0 0.0
    %494 = vmatprep.subr.mxu0 0.0
    %495 = vmatpush1.msra.mxu0 0.0
    %496 = vmatprep.subr.mxu0 0.0
    %497 = vmatpush1.msra.mxu0 0.0
    %498 = vmatprep.subr.mxu0 0.0
    %499 = vmatpush1.msra.mxu0 0.0
    %500 = vmatprep.subr.mxu0 0.0
    %501 = vmatpush1.msra.mxu0 0.0
    %502 = vmatprep.mubr.f32.mxu0 0.0
    %503 = vmatmul.mubr.f32.gmra.mrb[0].mxu0 %v427
    %v504 = vpop.f32.mrb[0].mxu0
    %v505 = vadd.f32 %v426, %v504
    %v506 = vpop.f32.mrb[0].mxu0
    %507 = vmatprep.mubr.f32.mxu0 0.0
    %508 = vmatmul.mubr.f32.gmra.mrb[0].mxu0 %v429
    %v509 = vpop.f32.mrb[0].mxu0
    %v510 = vadd.f32 %v426, %v509
    %v511 = vpop.f32.mrb[0].mxu0
    %512 = vmatprep.mubr.f32.mxu0 0.0
    %513 = vmatmul.mubr.f32.gmra.mrb[0].mxu0 %v431
    %v514 = vpop.f32.mrb[0].mxu0
    %v515 = vadd.f32 %v426, %v514
    %v516 = vpop.f32.mrb[0].mxu0
    %517 = vmatprep.mubr.f32.mxu0 0.0
    %518 = vmatmul.mubr.f32.gmra.mrb[0].mxu0 %v433
    %v519 = vpop.f32.mrb[0].mxu0
    %v520 = vadd.f32 %v426, %v519
    %v521 = vpop.f32.mrb[0].mxu0
    %522 = vdwg.mxu0
    %v523 = vadd.f32 %v418, %v505
    %v524 = vadd.f32 %v419, %v510
    %v525 = vadd.f32 %v420, %v515
    %v526 = vadd.f32 %v421, %v520
    %v531 = vrot.slane %v523, 7
    %v532 = vrot.slane %v524, 7
    %v533 = vsel %vm52, %v531, %v532
    %v534 = vrot.slane %v525, 7
    %v535 = vsel %vm52, %v532, %v534
    %v536 = vrot.slane %v526, 7
    %v537 = vsel %vm52, %v534, %v536
    %v542 = vsel %vm52, 0.0, %v531
    %v543 = vsel %vm44, 0.0, %v542
    %v544 = vsel %vm45, 0.0, %v533
    %v545 = vsel %vm46, 0.0, %v535
    %v546 = vsel %vm47, 0.0, %v537
    %v547 = vrot.slane %v523, 1
    %v548 = vrot.slane %v524, 1
    %v549 = vsel %vm73, %v547, %v548
    %v550 = vrot.slane %v525, 1
    %v551 = vsel %vm73, %v548, %v550
    %v552 = vrot.slane %v526, 1
    %v553 = vsel %vm73, %v550, %v552
    %v558 = vsel %vm73, %v552, 0.0
    %v559 = vsel %vm69, 0.0, %v549
    %v560 = vsel %vm70, 0.0, %v551
    %v561 = vsel %vm71, 0.0, %v553
    %v562 = vsel %vm72, 0.0, %v558
    %563 = vrot.lane.b32.xlu0 %v523, 8
    %v564 = vpop.permute.xlu0 %563
    %565 = vrot.lane.b32.xlu0 %v524, 8
    %v566 = vpop.permute.xlu0 %565
    %567 = vrot.lane.b32.xlu0 %v525, 8
    %v568 = vpop.permute.xlu0 %567
    %569 = vrot.lane.b32.xlu0 %v526, 8
    %v570 = vpop.permute.xlu0 %569
    %579 = vrot.lane.b32.xlu0 %v559, 16
    %v580 = vpop.permute.xlu0 %579
    %581 = vrot.lane.b32.xlu0 %v560, 16
    %v582 = vpop.permute.xlu0 %581
    %583 = vrot.lane.b32.xlu0 %v561, 16
    %v584 = vpop.permute.xlu0 %583
    %585 = vrot.lane.b32.xlu0 %v562, 16
    %v586 = vpop.permute.xlu0 %585
    %v591 = vsel %vm123, %v543, %v564
    %v592 = vsel %vm123, %v544, %v566
    %v593 = vsel %vm123, %v545, %v568
    %v594 = vsel %vm123, %v546, %v570
    %v595 = vsel %vm308, %v591, %v580
    %v596 = vsel %vm308, %v592, %v582
    %v597 = vsel %vm308, %v593, %v584
    %v598 = vsel %vm308, %v594, %v586
    %v599 = vld [vmem:[#allocation2 + $0x30] sm:$0xff]
    %v600 = vld [vmem:[#allocation2 + $0x38] sm:$0xff]
    %v601 = vld [vmem:[#allocation2 + $0x40] sm:$0xff]
    %v602 = vlaneseq
    %v603 = vshrl.u32 %v602, 7
    %v604 = vsub.s32 3, %v603
    %v605 = vrot.slane %v28, %v604
    %v607 = vsel %vm320, %v595, 0
    %v610 = vsel %vm320, %v596, 0
    %v613 = vsel %vm320, %v597, 0
    %v616 = vsel %vm320, %v598, 0
    %618 = vmatprep.subr.mxu0 0.0
    %619 = vmatpush1.msra.mxu0 %v599
    %620 = vmatprep.subr.mxu0 0.0
    %621 = vmatpush1.msra.mxu0 %v600
    %622 = vmatprep.subr.mxu0 0.0
    %623 = vmatpush1.msra.mxu0 %v601
    %624 = vmatprep.subr.mxu0 0.0
    %625 = vmatpush1.msra.mxu0 0.0
    %626 = vmatprep.subr.mxu0 0.0
    %627 = vmatpush1.msra.mxu0 0.0
    %628 = vmatprep.subr.mxu0 0.0
    %629 = vmatpush1.msra.mxu0 0.0
    %630 = vmatprep.subr.mxu0 0.0
    %631 = vmatpush1.msra.mxu0 0.0
    %632 = vmatprep.subr.mxu0 0.0
    %633 = vmatpush1.msra.mxu0 0.0
    %634 = vmatprep.subr.mxu0 0.0
    %635 = vmatpush1.msra.mxu0 0.0
    %636 = vmatprep.subr.mxu0 0.0
    %637 = vmatpush1.msra.mxu0 0.0
    %638 = vmatprep.subr.mxu0 0.0
    %639 = vmatpush1.msra.mxu0 0.0
    %640 = vmatprep.subr.mxu0 0.0
    %641 = vmatpush1.msra.mxu0 0.0
    %642 = vmatprep.subr.mxu0 0.0
    %643 = vmatpush1.msra.mxu0 0.0
    %644 = vmatprep.subr.mxu0 0.0
    %645 = vmatpush1.msra.mxu0 0.0
    %646 = vmatprep.subr.mxu0 0.0
    %647 = vmatpush1.msra.mxu0 0.0
    %648 = vmatprep.subr.mxu0 0.0
    %649 = vmatpush1.msra.mxu0 0.0
    %650 = vmatprep.subr.mxu0 0.0
    %651 = vmatpush1.msra.mxu0 0.0
    %652 = vmatprep.subr.mxu0 0.0
    %653 = vmatpush1.msra.mxu0 0.0
    %654 = vmatprep.subr.mxu0 0.0
    %655 = vmatpush1.msra.mxu0 0.0
    %656 = vmatprep.subr.mxu0 0.0
    %657 = vmatpush1.msra.mxu0 0.0
    %658 = vmatprep.subr.mxu0 0.0
    %659 = vmatpush1.msra.mxu0 0.0
    %660 = vmatprep.subr.mxu0 0.0
    %661 = vmatpush1.msra.mxu0 0.0
    %662 = vmatprep.subr.mxu0 0.0
    %663 = vmatpush1.msra.mxu0 0.0
    %664 = vmatprep.subr.mxu0 0.0
    %665 = vmatpush1.msra.mxu0 0.0
    %666 = vmatprep.subr.mxu0 0.0
    %667 = vmatpush1.msra.mxu0 0.0
    %668 = vmatprep.subr.mxu0 0.0
    %669 = vmatpush1.msra.mxu0 0.0
    %670 = vmatprep.subr.mxu0 0.0
    %671 = vmatpush1.msra.mxu0 0.0
    %672 = vmatprep.subr.mxu0 0.0
    %673 = vmatpush1.msra.mxu0 0.0
    %674 = vmatprep.subr.mxu0 0.0
    %675 = vmatpush1.msra.mxu0 0.0
    %676 = vmatprep.subr.mxu0 0.0
    %677 = vmatpush1.msra.mxu0 0.0
    %678 = vmatprep.subr.mxu0 0.0
    %679 = vmatpush1.msra.mxu0 0.0
    %680 = vmatprep.subr.mxu0 0.0
    %681 = vmatpush1.msra.mxu0 0.0
    %682 = vmatprep.mubr.f32.mxu0 0.0
    %683 = vmatmul.mubr.f32.gmra.mrb[0].mxu0 %v607
    %v684 = vpop.f32.mrb[0].mxu0
    %v685 = vadd.f32 %v605, %v684
    %v686 = vpop.f32.mrb[0].mxu0
    %687 = vmatprep.mubr.f32.mxu0 0.0
    %688 = vmatmul.mubr.f32.gmra.mrb[0].mxu0 %v610
    %v689 = vpop.f32.mrb[0].mxu0
    %v690 = vadd.f32 %v605, %v689
    %v691 = vpop.f32.mrb[0].mxu0
    %692 = vmatprep.mubr.f32.mxu0 0.0
    %693 = vmatmul.mubr.f32.gmra.mrb[0].mxu0 %v613
    %v694 = vpop.f32.mrb[0].mxu0
    %v695 = vadd.f32 %v605, %v694
    %v696 = vpop.f32.mrb[0].mxu0
    %697 = vmatprep.mubr.f32.mxu0 0.0
    %698 = vmatmul.mubr.f32.gmra.mrb[0].mxu0 %v616
    %v699 = vpop.f32.mrb[0].mxu0
    %v700 = vadd.f32 %v605, %v699
    %v701 = vpop.f32.mrb[0].mxu0
    %702 = vdwg.mxu0
    %v703 = vmax.f32 %v685, 0.0
    %v704 = vmax.f32 %v690, 0.0
    %v705 = vmax.f32 %v695, 0.0
    %v706 = vmax.f32 %v700, 0.0
    %v711 = vrot.slane %v703, 7
    %v712 = vrot.slane %v704, 7
    %v713 = vsel %vm52, %v711, %v712
    %v714 = vrot.slane %v705, 7
    %v715 = vsel %vm52, %v712, %v714
    %v716 = vrot.slane %v706, 7
    %v717 = vsel %vm52, %v714, %v716
    %v722 = vsel %vm52, 0.0, %v711
    %v723 = vsel %vm44, 0.0, %v722
    %v724 = vsel %vm45, 0.0, %v713
    %v725 = vsel %vm46, 0.0, %v715
    %v726 = vsel %vm47, 0.0, %v717
    %v727 = vrot.slane %v703, 1
    %v728 = vrot.slane %v704, 1
    %v729 = vsel %vm73, %v727, %v728
    %v730 = vrot.slane %v705, 1
    %v731 = vsel %vm73, %v728, %v730
    %v732 = vrot.slane %v706, 1
    %v733 = vsel %vm73, %v730, %v732
    %v738 = vsel %vm73, %v732, 0.0
    %v739 = vsel %vm69, 0.0, %v729
    %v740 = vsel %vm70, 0.0, %v731
    %v741 = vsel %vm71, 0.0, %v733
    %v742 = vsel %vm72, 0.0, %v738
    %743 = vrot.lane.b32.xlu0 %v703, 8
    %v744 = vpop.permute.xlu0 %743
    %745 = vrot.lane.b32.xlu0 %v704, 8
    %v746 = vpop.permute.xlu0 %745
    %747 = vrot.lane.b32.xlu0 %v705, 8
    %v748 = vpop.permute.xlu0 %747
    %749 = vrot.lane.b32.xlu0 %v706, 8
    %v750 = vpop.permute.xlu0 %749
    %759 = vrot.lane.b32.xlu0 %v739, 16
    %v760 = vpop.permute.xlu0 %759
    %761 = vrot.lane.b32.xlu0 %v740, 16
    %v762 = vpop.permute.xlu0 %761
    %763 = vrot.lane.b32.xlu0 %v741, 16
    %v764 = vpop.permute.xlu0 %763
    %765 = vrot.lane.b32.xlu0 %v742, 16
    %v766 = vpop.permute.xlu0 %765
    %v771 = vsel %vm123, %v723, %v744
    %v772 = vsel %vm123, %v724, %v746
    %v773 = vsel %vm123, %v725, %v748
    %v774 = vsel %vm123, %v726, %v750
    %v775 = vsel %vm308, %v771, %v760
    %v776 = vsel %vm308, %v772, %v762
    %v777 = vsel %vm308, %v773, %v764
    %v778 = vsel %vm308, %v774, %v766
    %v779 = vld [vmem:[#allocation2 + $0x48] sm:$0xff]
    %v780 = vld [vmem:[#allocation2 + $0x50] sm:$0xff]
    %v781 = vld [vmem:[#allocation2 + $0x58] sm:$0xff]
    %v782 = vlaneseq
    %v783 = vshrl.u32 %v782, 7
    %v784 = vsub.s32 4, %v783
    %v785 = vrot.slane %v28, %v784
    %v787 = vsel %vm320, %v775, 0
    %v790 = vsel %vm320, %v776, 0
    %v793 = vsel %vm320, %v777, 0
    %v796 = vsel %vm320, %v778, 0
    %798 = vmatprep.subr.mxu0 0.0
    %799 = vmatpush1.msra.mxu0 %v779
    %800 = vmatprep.subr.mxu0 0.0
    %801 = vmatpush1.msra.mxu0 %v780
    %802 = vmatprep.subr.mxu0 0.0
    %803 = vmatpush1.msra.mxu0 %v781
    %804 = vmatprep.subr.mxu0 0.0
    %805 = vmatpush1.msra.mxu0 0.0
    %806 = vmatprep.subr.mxu0 0.0
    %807 = vmatpush1.msra.mxu0 0.0
    %808 = vmatprep.subr.mxu0 0.0
    %809 = vmatpush1.msra.mxu0 0.0
    %810 = vmatprep.subr.mxu0 0.0
    %811 = vmatpush1.msra.mxu0 0.0
    %812 = vmatprep.subr.mxu0 0.0
    %813 = vmatpush1.msra.mxu0 0.0
    %814 = vmatprep.subr.mxu0 0.0
    %815 = vmatpush1.msra.mxu0 0.0
    %816 = vmatprep.subr.mxu0 0.0
    %817 = vmatpush1.msra.mxu0 0.0
    %818 = vmatprep.subr.mxu0 0.0
    %819 = vmatpush1.msra.mxu0 0.0
    %820 = vmatprep.subr.mxu0 0.0
    %821 = vmatpush1.msra.mxu0 0.0
    %822 = vmatprep.subr.mxu0 0.0
    %823 = vmatpush1.msra.mxu0 0.0
    %824 = vmatprep.subr.mxu0 0.0
    %825 = vmatpush1.msra.mxu0 0.0
    %826 = vmatprep.subr.mxu0 0.0
    %827 = vmatpush1.msra.mxu0 0.0
    %828 = vmatprep.subr.mxu0 0.0
    %829 = vmatpush1.msra.mxu0 0.0
    %830 = vmatprep.subr.mxu0 0.0
    %831 = vmatpush1.msra.mxu0 0.0
    %832 = vmatprep.subr.mxu0 0.0
    %833 = vmatpush1.msra.mxu0 0.0
    %834 = vmatprep.subr.mxu0 0.0
    %835 = vmatpush1.msra.mxu0 0.0
    %836 = vmatprep.subr.mxu0 0.0
    %837 = vmatpush1.msra.mxu0 0.0
    %838 = vmatprep.subr.mxu0 0.0
    %839 = vmatpush1.msra.mxu0 0.0
    %840 = vmatprep.subr.mxu0 0.0
    %841 = vmatpush1.msra.mxu0 0.0
    %842 = vmatprep.subr.mxu0 0.0
    %843 = vmatpush1.msra.mxu0 0.0
    %844 = vmatprep.subr.mxu0 0.0
    %845 = vmatpush1.msra.mxu0 0.0
    %846 = vmatprep.subr.mxu0 0.0
    %847 = vmatpush1.msra.mxu0 0.0
    %848 = vmatprep.subr.mxu0 0.0
    %849 = vmatpush1.msra.mxu0 0.0
    %850 = vmatprep.subr.mxu0 0.0
    %851 = vmatpush1.msra.mxu0 0.0
    %852 = vmatprep.subr.mxu0 0.0
    %853 = vmatpush1.msra.mxu0 0.0
    %854 = vmatprep.subr.mxu0 0.0
    %855 = vmatpush1.msra.mxu0 0.0
    %856 = vmatprep.subr.mxu0 0.0
    %857 = vmatpush1.msra.mxu0 0.0
    %858 = vmatprep.subr.mxu0 0.0
    %859 = vmatpush1.msra.mxu0 0.0
    %860 = vmatprep.subr.mxu0 0.0
    %861 = vmatpush1.msra.mxu0 0.0
    %862 = vmatprep.mubr.f32.mxu0 0.0
    %863 = vmatmul.mubr.f32.gmra.mrb[0].mxu0 %v787
    %v864 = vpop.f32.mrb[0].mxu0
    %v865 = vadd.f32 %v785, %v864
    %v866 = vpop.f32.mrb[0].mxu0
    %867 = vmatprep.mubr.f32.mxu0 0.0
    %868 = vmatmul.mubr.f32.gmra.mrb[0].mxu0 %v790
    %v869 = vpop.f32.mrb[0].mxu0
    %v870 = vadd.f32 %v785, %v869
    %v871 = vpop.f32.mrb[0].mxu0
    %872 = vmatprep.mubr.f32.mxu0 0.0
    %873 = vmatmul.mubr.f32.gmra.mrb[0].mxu0 %v793
    %v874 = vpop.f32.mrb[0].mxu0
    %v875 = vadd.f32 %v785, %v874
    %v876 = vpop.f32.mrb[0].mxu0
    %877 = vmatprep.mubr.f32.mxu0 0.0
    %878 = vmatmul.mubr.f32.gmra.mrb[0].mxu0 %v796
    %v879 = vpop.f32.mrb[0].mxu0
    %v880 = vadd.f32 %v785, %v879
    %v881 = vpop.f32.mrb[0].mxu0
    %882 = vdwg.mxu0
    %v883 = vmax.f32 %v865, 0.0
    %v884 = vmax.f32 %v870, 0.0
    %v885 = vmax.f32 %v875, 0.0
    %v886 = vmax.f32 %v880, 0.0
    %v887 = vadd.f32 %v883, %v523
    %v888 = vadd.f32 %v884, %v524
    %v889 = vadd.f32 %v885, %v525
    %v890 = vadd.f32 %v886, %v526
    %v895 = vrot.slane %v887, 1
    %v896 = vrot.slane %v888, 1
    %v897 = vsel %vm73, %v895, %v896
    %v898 = vrot.slane %v889, 1
    %v899 = vsel %vm73, %v896, %v898
    %v900 = vrot.slane %v890, 1
    %v901 = vsel %vm73, %v898, %v900
    %v906 = vsel %vm73, %v900, 0.0
    %v907 = vmax.f32 %v887, %v897
    %v908 = vmax.f32 %v888, %v899
    %v909 = vmax.f32 %v889, %v901
    %v910 = vmax.f32 %v890, %v906
    %v911 = vld [vmem:[#allocation2 + $0x60] sm:$0xff]
    %v912 = vld [vmem:[#allocation2 + $0x68] sm:$0xff]
    %vm913 = vcmask 261120
    %v915 = vsel %vm913, %v911, 0
    %v918 = vsel %vm913, %v912, 0
    %920 = vmatprep.subr.mxu0 0.0
    %921 = vmatpush1.msra.mxu0 %v907
    %922 = vmatprep.subr.mxu0 0.0
    %923 = vmatpush1.msra.mxu0 %v908
    %924 = vmatprep.subr.mxu0 0.0
    %925 = vmatpush1.msra.mxu0 %v909
    %926 = vmatprep.subr.mxu0 0.0
    %927 = vmatpush1.msra.mxu0 %v910
    %928 = vmatprep.subr.mxu0 0.0
    %929 = vmatpush1.msra.mxu0 0.0
    %930 = vmatprep.subr.mxu0 0.0
    %931 = vmatpush1.msra.mxu0 0.0
    %932 = vmatprep.subr.mxu0 0.0
    %933 = vmatpush1.msra.mxu0 0.0
    %934 = vmatprep.subr.mxu0 0.0
    %935 = vmatpush1.msra.mxu0 0.0
    %936 = vmatprep.subr.mxu0 0.0
    %937 = vmatpush1.msra.mxu0 0.0
    %938 = vmatprep.subr.mxu0 0.0
    %939 = vmatpush1.msra.mxu0 0.0
    %940 = vmatprep.subr.mxu0 0.0
    %941 = vmatpush1.msra.mxu0 0.0
    %942 = vmatprep.subr.mxu0 0.0
    %943 = vmatpush1.msra.mxu0 0.0
    %944 = vmatprep.subr.mxu0 0.0
    %945 = vmatpush1.msra.mxu0 0.0
    %946 = vmatprep.subr.mxu0 0.0
    %947 = vmatpush1.msra.mxu0 0.0
    %948 = vmatprep.subr.mxu0 0.0
    %949 = vmatpush1.msra.mxu0 0.0
    %950 = vmatprep.subr.mxu0 0.0
    %951 = vmatpush1.msra.mxu0 0.0
    %952 = vmatprep.subr.mxu0 0.0
    %953 = vmatpush1.msra.mxu0 0.0
    %954 = vmatprep.subr.mxu0 0.0
    %955 = vmatpush1.msra.mxu0 0.0
    %956 = vmatprep.subr.mxu0 0.0
    %957 = vmatpush1.msra.mxu0 0.0
    %958 = vmatprep.subr.mxu0 0.0
    %959 = vmatpush1.msra.mxu0 0.0
    %960 = vmatprep.subr.mxu0 0.0
    %961 = vmatpush1.msra.mxu0 0.0
    %962 = vmatprep.subr.mxu0 0.0
    %963 = vmatpush1.msra.mxu0 0.0
    %964 = vmatprep.subr.mxu0 0.0
    %965 = vmatpush1.msra.mxu0 0.0
    %966 = vmatprep.subr.mxu0 0.0
    %967 = vmatpush1.msra.mxu0 0.0
    %968 = vmatprep.subr.mxu0 0.0
    %969 = vmatpush1.msra.mxu0 0.0
    %970 = vmatprep.subr.mxu0 0.0
    %971 = vmatpush1.msra.mxu0 0.0
    %972 = vmatprep.subr.mxu0 0.0
    %973 = vmatpush1.msra.mxu0 0.0
    %974 = vmatprep.subr.mxu0 0.0
    %975 = vmatpush1.msra.mxu0 0.0
    %976 = vmatprep.subr.mxu0 0.0
    %977 = vmatpush1.msra.mxu0 0.0
    %978 = vmatprep.subr.mxu0 0.0
    %979 = vmatpush1.msra.mxu0 0.0
    %980 = vmatprep.subr.mxu0 0.0
    %981 = vmatpush1.msra.mxu0 0.0
    %982 = vmatprep.subr.mxu0 0.0
    %983 = vmatpush1.msra.mxu0 0.0
    %984 = vmatprep.mubr.f32.mxu0 0.0
    %985 = vmatmul.mubr.f32.gmra.mrb[0].mxu0 %v915
    %v986 = vpop.f32.mrb[0].mxu0
    %v987 = vadd.f32 0.0, %v986
    %v988 = vpop.f32.mrb[0].mxu0
    %989 = vmatprep.mubr.f32.mxu0 0.0
    %990 = vmatmul.mubr.f32.gmra.mrb[0].mxu0 %v918
    %v991 = vpop.f32.mrb[0].mxu0
    %v992 = vadd.f32 0.0, %v991
    %v993 = vpop.f32.mrb[0].mxu0
    %994 = vdwg.mxu0
    %v995 = vand.u32 %v36, 7
    %v996 = vand.u32 %v37, 7
    %vm997 = vcmp.eq.s32.totalorder %v995, 0
    %vm998 = vcmp.eq.s32.totalorder %v996, 0
    %v1001 = vrot.slane %v987, 7
    %v1002 = vrot.slane %v992, 7
    %v1003 = vsel %vm52, %v1001, %v1002
    %v1006 = vsel %vm52, 0.0, %v1001
    %v1007 = vsel %vm997, 0.0, %v1006
    %v1008 = vsel %vm998, 0.0, %v1003
    %vm1009 = vcmp.eq.s32.totalorder %v995, 7
    %vm1010 = vcmp.eq.s32.totalorder %v996, 7
    %v1011 = vrot.slane %v987, 1
    %v1012 = vrot.slane %v992, 1
    %v1013 = vsel %vm73, %v1011, %v1012
    %v1016 = vsel %vm73, %v1012, 0.0
    %v1017 = vsel %vm1009, 0.0, %v1013
    %v1018 = vsel %vm1010, 0.0, %v1016
    %1019 = vrot.lane.b32.xlu0 %v987, 8
    %v1020 = vpop.permute.xlu0 %1019
    %1021 = vrot.lane.b32.xlu0 %v992, 8
    %v1022 = vpop.permute.xlu0 %1021
    %1027 = vrot.lane.b32.xlu0 %v1017, 16
    %v1028 = vpop.permute.xlu0 %1027
    %1029 = vrot.lane.b32.xlu0 %v1018, 16
    %v1030 = vpop.permute.xlu0 %1029
    %v1033 = vsel %vm123, %v1007, %v1020
    %v1034 = vsel %vm123, %v1008, %v1022
    %v1035 = vsel %vm308, %v1033, %v1028
    %v1036 = vsel %vm308, %v1034, %v1030
    %v1037 = vld [vmem:[#allocation2 + $0x70] sm:$0xff]
    %v1038 = vld [vmem:[#allocation2 + $0x78] sm:$0xff]
    %v1039 = vld [vmem:[#allocation2 + $0x80] sm:$0xff]
    %v1040 = vlaneseq
    %v1041 = vshrl.u32 %v1040, 7
    %v1042 = vsub.s32 5, %v1041
    %v1043 = vrot.slane %v28, %v1042
    %v1045 = vsel %vm320, %v1035, 0
    %v1048 = vsel %vm320, %v1036, 0
    %1050 = vmatprep.subr.mxu0 0.0
    %1051 = vmatpush1.msra.mxu0 %v1037
    %1052 = vmatprep.subr.mxu0 0.0
    %1053 = vmatpush1.msra.mxu0 %v1038
    %1054 = vmatprep.subr.mxu0 0.0
    %1055 = vmatpush1.msra.mxu0 %v1039
    %1056 = vmatprep.subr.mxu0 0.0
    %1057 = vmatpush1.msra.mxu0 0.0
    %1058 = vmatprep.subr.mxu0 0.0
    %1059 = vmatpush1.msra.mxu0 0.0
    %1060 = vmatprep.subr.mxu0 0.0
    %1061 = vmatpush1.msra.mxu0 0.0
    %1062 = vmatprep.subr.mxu0 0.0
    %1063 = vmatpush1.msra.mxu0 0.0
    %1064 = vmatprep.subr.mxu0 0.0
    %1065 = vmatpush1.msra.mxu0 0.0
    %1066 = vmatprep.subr.mxu0 0.0
    %1067 = vmatpush1.msra.mxu0 0.0
    %1068 = vmatprep.subr.mxu0 0.0
    %1069 = vmatpush1.msra.mxu0 0.0
    %1070 = vmatprep.subr.mxu0 0.0
    %1071 = vmatpush1.msra.mxu0 0.0
    %1072 = vmatprep.subr.mxu0 0.0
    %1073 = vmatpush1.msra.mxu0 0.0
    %1074 = vmatprep.subr.mxu0 0.0
    %1075 = vmatpush1.msra.mxu0 0.0
    %1076 = vmatprep.subr.mxu0 0.0
    %1077 = vmatpush1.msra.mxu0 0.0
    %1078 = vmatprep.subr.mxu0 0.0
    %1079 = vmatpush1.msra.mxu0 0.0
    %1080 = vmatprep.subr.mxu0 0.0
    %1081 = vmatpush1.msra.mxu0 0.0
    %1082 = vmatprep.subr.mxu0 0.0
    %1083 = vmatpush1.msra.mxu0 0.0
    %1084 = vmatprep.subr.mxu0 0.0
    %1085 = vmatpush1.msra.mxu0 0.0
    %1086 = vmatprep.subr.mxu0 0.0
    %1087 = vmatpush1.msra.mxu0 0.0
    %1088 = vmatprep.subr.mxu0 0.0
    %1089 = vmatpush1.msra.mxu0 0.0
    %1090 = vmatprep.subr.mxu0 0.0
    %1091 = vmatpush1.msra.mxu0 0.0
    %1092 = vmatprep.subr.mxu0 0.0
    %1093 = vmatpush1.msra.mxu0 0.0
    %1094 = vmatprep.subr.mxu0 0.0
    %1095 = vmatpush1.msra.mxu0 0.0
    %1096 = vmatprep.subr.mxu0 0.0
    %1097 = vmatpush1.msra.mxu0 0.0
    %1098 = vmatprep.subr.mxu0 0.0
    %1099 = vmatpush1.msra.mxu0 0.0
    %1100 = vmatprep.subr.mxu0 0.0
    %1101 = vmatpush1.msra.mxu0 0.0
    %1102 = vmatprep.subr.mxu0 0.0
    %1103 = vmatpush1.msra.mxu0 0.0
    %1104 = vmatprep.subr.mxu0 0.0
    %1105 = vmatpush1.msra.mxu0 0.0
    %1106 = vmatprep.subr.mxu0 0.0
    %1107 = vmatpush1.msra.mxu0 0.0
    %1108 = vmatprep.subr.mxu0 0.0
    %1109 = vmatpush1.msra.mxu0 0.0
    %1110 = vmatprep.subr.mxu0 0.0
    %1111 = vmatpush1.msra.mxu0 0.0
    %1112 = vmatprep.subr.mxu0 0.0
    %1113 = vmatpush1.msra.mxu0 0.0
    %1114 = vmatprep.mubr.f32.mxu0 0.0
    %1115 = vmatmul.mubr.f32.gmra.mrb[0].mxu0 %v1045
    %v1116 = vpop.f32.mrb[0].mxu0
    %v1117 = vadd.f32 %v1043, %v1116
    %v1118 = vpop.f32.mrb[0].mxu0
    %1119 = vmatprep.mubr.f32.mxu0 0.0
    %1120 = vmatmul.mubr.f32.gmra.mrb[0].mxu0 %v1048
    %v1121 = vpop.f32.mrb[0].mxu0
    %v1122 = vadd.f32 %v1043, %v1121
    %v1123 = vpop.f32.mrb[0].mxu0
    %1124 = vdwg.mxu0
    %v1125 = vmax.f32 %v1117, 0.0
    %v1126 = vmax.f32 %v1122, 0.0
    %v1129 = vrot.slane %v1125, 7
    %v1130 = vrot.slane %v1126, 7
    %v1131 = vsel %vm52, %v1129, %v1130
    %v1134 = vsel %vm52, 0.0, %v1129
    %v1135 = vsel %vm997, 0.0, %v1134
    %v1136 = vsel %vm998, 0.0, %v1131
    %v1137 = vrot.slane %v1125, 1
    %v1138 = vrot.slane %v1126, 1
    %v1139 = vsel %vm73, %v1137, %v1138
    %v1142 = vsel %vm73, %v1138, 0.0
    %v1143 = vsel %vm1009, 0.0, %v1139
    %v1144 = vsel %vm1010, 0.0, %v1142
    %1145 = vrot.lane.b32.xlu0 %v1125, 16
    %v1146 = vpop.permute.xlu0 %1145
    %1147 = vrot.lane.b32.xlu0 %v1126, 16
    %v1148 = vpop.permute.xlu0 %1147
    %1153 = vrot.lane.b32.xlu0 %v1143, 32
    %v1154 = vpop.permute.xlu0 %1153
    %1155 = vrot.lane.b32.xlu0 %v1144, 32
    %v1156 = vpop.permute.xlu0 %1155
    %v1159 = vsel %vm308, %v1135, %v1146
    %v1160 = vsel %vm308, %v1136, %v1148
    %v1161 = vsel %vm913, %v1159, %v1154
    %v1162 = vsel %vm913, %v1160, %v1156
    %v1163 = vld [vmem:[#allocation2 + $0x88] sm:$0xff]
    %v1164 = vld [vmem:[#allocation2 + $0x90] sm:$0xff]
    %v1165 = vld [vmem:[#allocation2 + $0x98] sm:$0xff]
    %v1166 = vld [vmem:[#allocation2 + $0xa0] sm:$0xff]
    %v1167 = vld [vmem:[#allocation2 + $0xa8] sm:$0xff]
    %v1168 = vld [vmem:[#allocation2 + $0xb0] sm:$0xff]
    %v1169 = vlaneseq
    %v1170 = vshrl.u32 %v1169, 7
    %v1171 = vsub.s32 6, %v1170
    %v1172 = vrot.slane %v28, %v1171
    %vm1173 = vcmask 392192
    %v1175 = vsel %vm1173, %v1161, 0
    %v1178 = vsel %vm1173, %v1162, 0
    %1180 = vmatprep.subr.mxu0 0.0
    %1181 = vmatpush1.msra.mxu0 %v1163
    %1182 = vmatprep.subr.mxu0 0.0
    %1183 = vmatpush1.msra.mxu0 %v1164
    %1184 = vmatprep.subr.mxu0 0.0
    %1185 = vmatpush1.msra.mxu0 %v1165
    %1186 = vmatprep.subr.mxu0 0.0
    %1187 = vmatpush1.msra.mxu0 %v1166
    %1188 = vmatprep.subr.mxu0 0.0
    %1189 = vmatpush1.msra.mxu0 %v1167
    %1190 = vmatprep.subr.mxu0 0.0
    %1191 = vmatpush1.msra.mxu0 %v1168
    %1192 = vmatprep.subr.mxu0 0.0
    %1193 = vmatpush1.msra.mxu0 0.0
    %1194 = vmatprep.subr.mxu0 0.0
    %1195 = vmatpush1.msra.mxu0 0.0
    %1196 = vmatprep.subr.mxu0 0.0
    %1197 = vmatpush1.msra.mxu0 0.0
    %1198 = vmatprep.subr.mxu0 0.0
    %1199 = vmatpush1.msra.mxu0 0.0
    %1200 = vmatprep.subr.mxu0 0.0
    %1201 = vmatpush1.msra.mxu0 0.0
    %1202 = vmatprep.subr.mxu0 0.0
    %1203 = vmatpush1.msra.mxu0 0.0
    %1204 = vmatprep.subr.mxu0 0.0
    %1205 = vmatpush1.msra.mxu0 0.0
    %1206 = vmatprep.subr.mxu0 0.0
    %1207 = vmatpush1.msra.mxu0 0.0
    %1208 = vmatprep.subr.mxu0 0.0
    %1209 = vmatpush1.msra.mxu0 0.0
    %1210 = vmatprep.subr.mxu0 0.0
    %1211 = vmatpush1.msra.mxu0 0.0
    %1212 = vmatprep.subr.mxu0 0.0
    %1213 = vmatpush1.msra.mxu0 0.0
    %1214 = vmatprep.subr.mxu0 0.0
    %1215 = vmatpush1.msra.mxu0 0.0
    %1216 = vmatprep.subr.mxu0 0.0
    %1217 = vmatpush1.msra.mxu0 0.0
    %1218 = vmatprep.subr.mxu0 0.0
    %1219 = vmatpush1.msra.mxu0 0.0
    %1220 = vmatprep.subr.mxu0 0.0
    %1221 = vmatpush1.msra.mxu0 0.0
    %1222 = vmatprep.subr.mxu0 0.0
    %1223 = vmatpush1.msra.mxu0 0.0
    %1224 = vmatprep.subr.mxu0 0.0
    %1225 = vmatpush1.msra.mxu0 0.0
    %1226 = vmatprep.subr.mxu0 0.0
    %1227 = vmatpush1.msra.mxu0 0.0
    %1228 = vmatprep.subr.mxu0 0.0
    %1229 = vmatpush1.msra.mxu0 0.0
    %1230 = vmatprep.subr.mxu0 0.0
    %1231 = vmatpush1.msra.mxu0 0.0
    %1232 = vmatprep.subr.mxu0 0.0
    %1233 = vmatpush1.msra.mxu0 0.0
    %1234 = vmatprep.subr.mxu0 0.0
    %1235 = vmatpush1.msra.mxu0 0.0
    %1236 = vmatprep.subr.mxu0 0.0
    %1237 = vmatpush1.msra.mxu0 0.0
    %1238 = vmatprep.subr.mxu0 0.0
    %1239 = vmatpush1.msra.mxu0 0.0
    %1240 = vmatprep.subr.mxu0 0.0
    %1241 = vmatpush1.msra.mxu0 0.0
    %1242 = vmatprep.subr.mxu0 0.0
    %1243 = vmatpush1.msra.mxu0 0.0
    %1244 = vmatprep.mubr.f32.mxu0 0.0
    %1245 = vmatmul.mubr.f32.gmra.mrb[0].mxu0 %v1175
    %v1246 = vpop.f32.mrb[0].mxu0
    %v1247 = vadd.f32 %v1172, %v1246
    %v1248 = vpop.f32.mrb[0].mxu0
    %1249 = vmatprep.mubr.f32.mxu0 0.0
    %1250 = vmatmul.mubr.f32.gmra.mrb[0].mxu0 %v1178
    %v1251 = vpop.f32.mrb[0].mxu0
    %v1252 = vadd.f32 %v1172, %v1251
    %v1253 = vpop.f32.mrb[0].mxu0
    %1254 = vdwg.mxu0
    %v1255 = vmax.f32 %v1247, 0.0
    %v1256 = vmax.f32 %v1252, 0.0
    %v1257 = vld [vmem:[#allocation2 + $0xb8] sm:$0xff]
    %v1258 = vlaneseq
    %v1259 = vshrl.u32 %v1258, 7
    %v1260 = vsub.s32 7, %v1259
    %v1261 = vrot.slane %v28, %v1260
    %v1262 = vsel %vm123, %v987, 0
    %v1264 = vsel %vm123, %v992, 0
    %1266 = vmatprep.subr.mxu0 0.0
    %1267 = vmatpush1.msra.mxu0 %v1257
    %1268 = vmatprep.subr.mxu0 0.0
    %1269 = vmatpush1.msra.mxu0 0.0
    %1270 = vmatprep.subr.mxu0 0.0
    %1271 = vmatpush1.msra.mxu0 0.0
    %1272 = vmatprep.subr.mxu0 0.0
    %1273 = vmatpush1.msra.mxu0 0.0
    %1274 = vmatprep.subr.mxu0 0.0
    %1275 = vmatpush1.msra.mxu0 0.0
    %1276 = vmatprep.subr.mxu0 0.0
    %1277 = vmatpush1.msra.mxu0 0.0
    %1278 = vmatprep.subr.mxu0 0.0
    %1279 = vmatpush1.msra.mxu0 0.0
    %1280 = vmatprep.subr.mxu0 0.0
    %1281 = vmatpush1.msra.mxu0 0.0
    %1282 = vmatprep.subr.mxu0 0.0
    %1283 = vmatpush1.msra.mxu0 0.0
    %1284 = vmatprep.subr.mxu0 0.0
    %1285 = vmatpush1.msra.mxu0 0.0
    %1286 = vmatprep.subr.mxu0 0.0
    %1287 = vmatpush1.msra.mxu0 0.0
    %1288 = vmatprep.subr.mxu0 0.0
    %1289 = vmatpush1.msra.mxu0 0.0
    %1290 = vmatprep.subr.mxu0 0.0
    %1291 = vmatpush1.msra.mxu0 0.0
    %1292 = vmatprep.subr.mxu0 0.0
    %1293 = vmatpush1.msra.mxu0 0.0
    %1294 = vmatprep.subr.mxu0 0.0
    %1295 = vmatpush1.msra.mxu0 0.0
    %1296 = vmatprep.subr.mxu0 0.0
    %1297 = vmatpush1.msra.mxu0 0.0
    %1298 = vmatprep.subr.mxu0 0.0
    %1299 = vmatpush1.msra.mxu0 0.0
    %1300 = vmatprep.subr.mxu0 0.0
    %1301 = vmatpush1.msra.mxu0 0.0
    %1302 = vmatprep.subr.mxu0 0.0
    %1303 = vmatpush1.msra.mxu0 0.0
    %1304 = vmatprep.subr.mxu0 0.0
    %1305 = vmatpush1.msra.mxu0 0.0
    %1306 = vmatprep.subr.mxu0 0.0
    %1307 = vmatpush1.msra.mxu0 0.0
    %1308 = vmatprep.subr.mxu0 0.0
    %1309 = vmatpush1.msra.mxu0 0.0
    %1310 = vmatprep.subr.mxu0 0.0
    %1311 = vmatpush1.msra.mxu0 0.0
    %1312 = vmatprep.subr.mxu0 0.0
    %1313 = vmatpush1.msra.mxu0 0.0
    %1314 = vmatprep.subr.mxu0 0.0
    %1315 = vmatpush1.msra.mxu0 0.0
    %1316 = vmatprep.subr.mxu0 0.0
    %1317 = vmatpush1.msra.mxu0 0.0
    %1318 = vmatprep.subr.mxu0 0.0
    %1319 = vmatpush1.msra.mxu0 0.0
    %1320 = vmatprep.subr.mxu0 0.0
    %1321 = vmatpush1.msra.mxu0 0.0
    %1322 = vmatprep.subr.mxu0 0.0
    %1323 = vmatpush1.msra.mxu0 0.0
    %1324 = vmatprep.subr.mxu0 0.0
    %1325 = vmatpush1.msra.mxu0 0.0
    %1326 = vmatprep.subr.mxu0 0.0
    %1327 = vmatpush1.msra.mxu0 0.0
    %1328 = vmatprep.subr.mxu0 0.0
    %1329 = vmatpush1.msra.mxu0 0.0
    %1330 = vmatprep.mubr.f32.mxu0 0.0
    %1331 = vmatmul.mubr.f32.gmra.mrb[0].mxu0 %v1262
    %v1332 = vpop.f32.mrb[0].mxu0
    %v1333 = vadd.f32 %v1261, %v1332
    %v1334 = vpop.f32.mrb[0].mxu0
    %1335 = vmatprep.mubr.f32.mxu0 0.0
    %1336 = vmatmul.mubr.f32.gmra.mrb[0].mxu0 %v1264
    %v1337 = vpop.f32.mrb[0].mxu0
    %v1338 = vadd.f32 %v1261, %v1337
    %v1339 = vpop.f32.mrb[0].mxu0
    %1340 = vdwg.mxu0
    %v1341 = vadd.f32 %v1255, %v1333
    %v1342 = vadd.f32 %v1256, %v1338
    %v1345 = vrot.slane %v1341, 7
    %v1346 = vrot.slane %v1342, 7
    %v1347 = vsel %vm52, %v1345, %v1346
    %v1350 = vsel %vm52, 0.0, %v1345
    %v1351 = vsel %vm997, 0.0, %v1350
    %v1352 = vsel %vm998, 0.0, %v1347
    %v1353 = vrot.slane %v1341, 1
    %v1354 = vrot.slane %v1342, 1
    %v1355 = vsel %vm73, %v1353, %v1354
    %v1358 = vsel %vm73, %v1354, 0.0
    %v1359 = vsel %vm1009, 0.0, %v1355
    %v1360 = vsel %vm1010, 0.0, %v1358
    %1361 = vrot.lane.b32.xlu0 %v1341, 16
    %v1362 = vpop.permute.xlu0 %1361
    %1363 = vrot.lane.b32.xlu0 %v1342, 16
    %v1364 = vpop.permute.xlu0 %1363
    %1369 = vrot.lane.b32.xlu0 %v1359, 32
    %v1370 = vpop.permute.xlu0 %1369
    %1371 = vrot.lane.b32.xlu0 %v1360, 32
    %v1372 = vpop.permute.xlu0 %1371
    %v1375 = vsel %vm308, %v1351, %v1362
    %v1376 = vsel %vm308, %v1352, %v1364
    %v1377 = vsel %vm913, %v1375, %v1370
    %v1378 = vsel %vm913, %v1376, %v1372
    %v1379 = vld [vmem:[#allocation2 + $0xc0] sm:$0xff]
    %v1380 = vld [vmem:[#allocation2 + $0xc8] sm:$0xff]
    %v1381 = vld [vmem:[#allocation2 + $0xd0] sm:$0xff]
    %v1382 = vld [vmem:[#allocation2 + $0xd8] sm:$0xff]
    %v1383 = vld [vmem:[#allocation2 + $0xe0] sm:$0xff]
    %v1384 = vld [vmem:[#allocation2 + $0xe8] sm:$0xff]
    %v1385 = vlaneseq
    %v1386 = vshrl.u32 %v1385, 7
    %v1387 = vsub.s32 0, %v1386
    %v1388 = vrot.slane %v29, %v1387
    %v1390 = vsel %vm1173, %v1377, 0
    %v1393 = vsel %vm1173, %v1378, 0
    %1395 = vmatprep.subr.mxu0 0.0
    %1396 = vmatpush1.msra.mxu0 %v1379
    %1397 = vmatprep.subr.mxu0 0.0
    %1398 = vmatpush1.msra.mxu0 %v1380
    %1399 = vmatprep.subr.mxu0 0.0
    %1400 = vmatpush1.msra.mxu0 %v1381
    %1401 = vmatprep.subr.mxu0 0.0
    %1402 = vmatpush1.msra.mxu0 %v1382
    %1403 = vmatprep.subr.mxu0 0.0
    %1404 = vmatpush1.msra.mxu0 %v1383
    %1405 = vmatprep.subr.mxu0 0.0
    %1406 = vmatpush1.msra.mxu0 %v1384
    %1407 = vmatprep.subr.mxu0 0.0
    %1408 = vmatpush1.msra.mxu0 0.0
    %1409 = vmatprep.subr.mxu0 0.0
    %1410 = vmatpush1.msra.mxu0 0.0
    %1411 = vmatprep.subr.mxu0 0.0
    %1412 = vmatpush1.msra.mxu0 0.0
    %1413 = vmatprep.subr.mxu0 0.0
    %1414 = vmatpush1.msra.mxu0 0.0
    %1415 = vmatprep.subr.mxu0 0.0
    %1416 = vmatpush1.msra.mxu0 0.0
    %1417 = vmatprep.subr.mxu0 0.0
    %1418 = vmatpush1.msra.mxu0 0.0
    %1419 = vmatprep.subr.mxu0 0.0
    %1420 = vmatpush1.msra.mxu0 0.0
    %1421 = vmatprep.subr.mxu0 0.0
    %1422 = vmatpush1.msra.mxu0 0.0
    %1423 = vmatprep.subr.mxu0 0.0
    %1424 = vmatpush1.msra.mxu0 0.0
    %1425 = vmatprep.subr.mxu0 0.0
    %1426 = vmatpush1.msra.mxu0 0.0
    %1427 = vmatprep.subr.mxu0 0.0
    %1428 = vmatpush1.msra.mxu0 0.0
    %1429 = vmatprep.subr.mxu0 0.0
    %1430 = vmatpush1.msra.mxu0 0.0
    %1431 = vmatprep.subr.mxu0 0.0
    %1432 = vmatpush1.msra.mxu0 0.0
    %1433 = vmatprep.subr.mxu0 0.0
    %1434 = vmatpush1.msra.mxu0 0.0
    %1435 = vmatprep.subr.mxu0 0.0
    %1436 = vmatpush1.msra.mxu0 0.0
    %1437 = vmatprep.subr.mxu0 0.0
    %1438 = vmatpush1.msra.mxu0 0.0
    %1439 = vmatprep.subr.mxu0 0.0
    %1440 = vmatpush1.msra.mxu0 0.0
    %1441 = vmatprep.subr.mxu0 0.0
    %1442 = vmatpush1.msra.mxu0 0.0
    %1443 = vmatprep.subr.mxu0 0.0
    %1444 = vmatpush1.msra.mxu0 0.0
    %1445 = vmatprep.subr.mxu0 0.0
    %1446 = vmatpush1.msra.mxu0 0.0
    %1447 = vmatprep.subr.mxu0 0.0
    %1448 = vmatpush1.msra.mxu0 0.0
    %1449 = vmatprep.subr.mxu0 0.0
    %1450 = vmatpush1.msra.mxu0 0.0
    %1451 = vmatprep.subr.mxu0 0.0
    %1452 = vmatpush1.msra.mxu0 0.0
    %1453 = vmatprep.subr.mxu0 0.0
    %1454 = vmatpush1.msra.mxu0 0.0
    %1455 = vmatprep.subr.mxu0 0.0
    %1456 = vmatpush1.msra.mxu0 0.0
    %1457 = vmatprep.subr.mxu0 0.0
    %1458 = vmatpush1.msra.mxu0 0.0
    %1459 = vmatprep.mubr.f32.mxu0 0.0
    %1460 = vmatmul.mubr.f32.gmra.mrb[0].mxu0 %v1390
    %v1461 = vpop.f32.mrb[0].mxu0
    %v1462 = vadd.f32 %v1388, %v1461
    %v1463 = vpop.f32.mrb[0].mxu0
    %1464 = vmatprep.mubr.f32.mxu0 0.0
    %1465 = vmatmul.mubr.f32.gmra.mrb[0].mxu0 %v1393
    %v1466 = vpop.f32.mrb[0].mxu0
    %v1467 = vadd.f32 %v1388, %v1466
    %v1468 = vpop.f32.mrb[0].mxu0
    %1469 = vdwg.mxu0
    %v1470 = vmax.f32 %v1462, 0.0
    %v1471 = vmax.f32 %v1467, 0.0
    %v1474 = vrot.slane %v1470, 7
    %v1475 = vrot.slane %v1471, 7
    %v1476 = vsel %vm52, %v1474, %v1475
    %v1479 = vsel %vm52, 0.0, %v1474
    %v1480 = vsel %vm997, 0.0, %v1479
    %v1481 = vsel %vm998, 0.0, %v1476
    %v1482 = vrot.slane %v1470, 1
    %v1483 = vrot.slane %v1471, 1
    %v1484 = vsel %vm73, %v1482, %v1483
    %v1487 = vsel %vm73, %v1483, 0.0
    %v1488 = vsel %vm1009, 0.0, %v1484
    %v1489 = vsel %vm1010, 0.0, %v1487
    %1490 = vrot.lane.b32.xlu0 %v1470, 16
    %v1491 = vpop.permute.xlu0 %1490
    %1492 = vrot.lane.b32.xlu0 %v1471, 16
    %v1493 = vpop.permute.xlu0 %1492
    %1498 = vrot.lane.b32.xlu0 %v1488, 32
    %v1499 = vpop.permute.xlu0 %1498
    %1500 = vrot.lane.b32.xlu0 %v1489, 32
    %v1501 = vpop.permute.xlu0 %1500
    %v1504 = vsel %vm308, %v1480, %v1491
    %v1505 = vsel %vm308, %v1481, %v1493
    %v1506 = vsel %vm913, %v1504, %v1499
    %v1507 = vsel %vm913, %v1505, %v1501
    %v1508 = vld [vmem:[#allocation2 + $0xf0] sm:$0xff]
    %v1509 = vld [vmem:[#allocation2 + $0xf8] sm:$0xff]
    %v1510 = vld [vmem:[#allocation2 + $0x100] sm:$0xff]
    %v1511 = vld [vmem:[#allocation2 + $0x108] sm:$0xff]
    %v1512 = vld [vmem:[#allocation2 + $0x110] sm:$0xff]
    %v1513 = vld [vmem:[#allocation2 + $0x118] sm:$0xff]
    %v1514 = vlaneseq
    %v1515 = vshrl.u32 %v1514, 7
    %v1516 = vsub.s32 1, %v1515
    %v1517 = vrot.slane %v29, %v1516
    %v1519 = vsel %vm1173, %v1506, 0
    %v1522 = vsel %vm1173, %v1507, 0
    %1524 = vmatprep.subr.mxu0 0.0
    %1525 = vmatpush1.msra.mxu0 %v1508
    %1526 = vmatprep.subr.mxu0 0.0
    %1527 = vmatpush1.msra.mxu0 %v1509
    %1528 = vmatprep.subr.mxu0 0.0
    %1529 = vmatpush1.msra.mxu0 %v1510
    %1530 = vmatprep.subr.mxu0 0.0
    %1531 = vmatpush1.msra.mxu0 %v1511
    %1532 = vmatprep.subr.mxu0 0.0
    %1533 = vmatpush1.msra.mxu0 %v1512
    %1534 = vmatprep.subr.mxu0 0.0
    %1535 = vmatpush1.msra.mxu0 %v1513
    %1536 = vmatprep.subr.mxu0 0.0
    %1537 = vmatpush1.msra.mxu0 0.0
    %1538 = vmatprep.subr.mxu0 0.0
    %1539 = vmatpush1.msra.mxu0 0.0
    %1540 = vmatprep.subr.mxu0 0.0
    %1541 = vmatpush1.msra.mxu0 0.0
    %1542 = vmatprep.subr.mxu0 0.0
    %1543 = vmatpush1.msra.mxu0 0.0
    %1544 = vmatprep.subr.mxu0 0.0
    %1545 = vmatpush1.msra.mxu0 0.0
    %1546 = vmatprep.subr.mxu0 0.0
    %1547 = vmatpush1.msra.mxu0 0.0
    %1548 = vmatprep.subr.mxu0 0.0
    %1549 = vmatpush1.msra.mxu0 0.0
    %1550 = vmatprep.subr.mxu0 0.0
    %1551 = vmatpush1.msra.mxu0 0.0
    %1552 = vmatprep.subr.mxu0 0.0
    %1553 = vmatpush1.msra.mxu0 0.0
    %1554 = vmatprep.subr.mxu0 0.0
    %1555 = vmatpush1.msra.mxu0 0.0
    %1556 = vmatprep.subr.mxu0 0.0
    %1557 = vmatpush1.msra.mxu0 0.0
    %1558 = vmatprep.subr.mxu0 0.0
    %1559 = vmatpush1.msra.mxu0 0.0
    %1560 = vmatprep.subr.mxu0 0.0
    %1561 = vmatpush1.msra.mxu0 0.0
    %1562 = vmatprep.subr.mxu0 0.0
    %1563 = vmatpush1.msra.mxu0 0.0
    %1564 = vmatprep.subr.mxu0 0.0
    %1565 = vmatpush1.msra.mxu0 0.0
    %1566 = vmatprep.subr.mxu0 0.0
    %1567 = vmatpush1.msra.mxu0 0.0
    %1568 = vmatprep.subr.mxu0 0.0
    %1569 = vmatpush1.msra.mxu0 0.0
    %1570 = vmatprep.subr.mxu0 0.0
    %1571 = vmatpush1.msra.mxu0 0.0
    %1572 = vmatprep.subr.mxu0 0.0
    %1573 = vmatpush1.msra.mxu0 0.0
    %1574 = vmatprep.subr.mxu0 0.0
    %1575 = vmatpush1.msra.mxu0 0.0
    %1576 = vmatprep.subr.mxu0 0.0
    %1577 = vmatpush1.msra.mxu0 0.0
    %1578 = vmatprep.subr.mxu0 0.0
    %1579 = vmatpush1.msra.mxu0 0.0
    %1580 = vmatprep.subr.mxu0 0.0
    %1581 = vmatpush1.msra.mxu0 0.0
    %1582 = vmatprep.subr.mxu0 0.0
    %1583 = vmatpush1.msra.mxu0 0.0
    %1584 = vmatprep.subr.mxu0 0.0
    %1585 = vmatpush1.msra.mxu0 0.0
    %1586 = vmatprep.subr.mxu0 0.0
    %1587 = vmatpush1.msra.mxu0 0.0
    %1588 = vmatprep.mubr.f32.mxu0 0.0
    %1589 = vmatmul.mubr.f32.gmra.mrb[0].mxu0 %v1519
    %v1590 = vpop.f32.mrb[0].mxu0
    %v1591 = vadd.f32 %v1517, %v1590
    %v1592 = vpop.f32.mrb[0].mxu0
    %1593 = vmatprep.mubr.f32.mxu0 0.0
    %1594 = vmatmul.mubr.f32.gmra.mrb[0].mxu0 %v1522
    %v1595 = vpop.f32.mrb[0].mxu0
    %v1596 = vadd.f32 %v1517, %v1595
    %v1597 = vpop.f32.mrb[0].mxu0
    %1598 = vdwg.mxu0
    %v1599 = vmax.f32 %v1591, 0.0
    %v1600 = vmax.f32 %v1596, 0.0
    %v1601 = vadd.f32 %v1599, %v1341
    %v1602 = vadd.f32 %v1600, %v1342
    %v1605 = vrot.slane %v1601, 1
    %v1606 = vrot.slane %v1602, 1
    %v1607 = vsel %vm73, %v1605, %v1606
    %v1610 = vsel %vm73, %v1606, 0.0
    %v1611 = vmax.f32 %v1601, %v1607
    %v1612 = vmax.f32 %v1602, %v1610
    %v1613 = vld [vmem:[#allocation2 + $0x120] sm:$0xff]
    %v1615 = vsel %vm308, %v1613, 0
    %1617 = vmatprep.subr.mxu0 0.0
    %1618 = vmatpush1.msra.mxu0 %v1611
    %1619 = vmatprep.subr.mxu0 0.0
    %1620 = vmatpush1.msra.mxu0 %v1612
    %1621 = vmatprep.subr.mxu0 0.0
    %1622 = vmatpush1.msra.mxu0 0.0
    %1623 = vmatprep.subr.mxu0 0.0
    %1624 = vmatpush1.msra.mxu0 0.0
    %1625 = vmatprep.subr.mxu0 0.0
    %1626 = vmatpush1.msra.mxu0 0.0
    %1627 = vmatprep.subr.mxu0 0.0
    %1628 = vmatpush1.msra.mxu0 0.0
    %1629 = vmatprep.subr.mxu0 0.0
    %1630 = vmatpush1.msra.mxu0 0.0
    %1631 = vmatprep.subr.mxu0 0.0
    %1632 = vmatpush1.msra.mxu0 0.0
    %1633 = vmatprep.subr.mxu0 0.0
    %1634 = vmatpush1.msra.mxu0 0.0
    %1635 = vmatprep.subr.mxu0 0.0
    %1636 = vmatpush1.msra.mxu0 0.0
    %1637 = vmatprep.subr.mxu0 0.0
    %1638 = vmatpush1.msra.mxu0 0.0
    %1639 = vmatprep.subr.mxu0 0.0
    %1640 = vmatpush1.msra.mxu0 0.0
    %1641 = vmatprep.subr.mxu0 0.0
    %1642 = vmatpush1.msra.mxu0 0.0
    %1643 = vmatprep.subr.mxu0 0.0
    %1644 = vmatpush1.msra.mxu0 0.0
    %1645 = vmatprep.subr.mxu0 0.0
    %1646 = vmatpush1.msra.mxu0 0.0
    %1647 = vmatprep.subr.mxu0 0.0
    %1648 = vmatpush1.msra.mxu0 0.0
    %1649 = vmatprep.subr.mxu0 0.0
    %1650 = vmatpush1.msra.mxu0 0.0
    %1651 = vmatprep.subr.mxu0 0.0
    %1652 = vmatpush1.msra.mxu0 0.0
    %1653 = vmatprep.subr.mxu0 0.0
    %1654 = vmatpush1.msra.mxu0 0.0
    %1655 = vmatprep.subr.mxu0 0.0
    %1656 = vmatpush1.msra.mxu0 0.0
    %1657 = vmatprep.subr.mxu0 0.0
    %1658 = vmatpush1.msra.mxu0 0.0
    %1659 = vmatprep.subr.mxu0 0.0
    %1660 = vmatpush1.msra.mxu0 0.0
    %1661 = vmatprep.subr.mxu0 0.0
    %1662 = vmatpush1.msra.mxu0 0.0
    %1663 = vmatprep.subr.mxu0 0.0
    %1664 = vmatpush1.msra.mxu0 0.0
    %1665 = vmatprep.subr.mxu0 0.0
    %1666 = vmatpush1.msra.mxu0 0.0
    %1667 = vmatprep.subr.mxu0 0.0
    %1668 = vmatpush1.msra.mxu0 0.0
    %1669 = vmatprep.subr.mxu0 0.0
    %1670 = vmatpush1.msra.mxu0 0.0
    %1671 = vmatprep.subr.mxu0 0.0
    %1672 = vmatpush1.msra.mxu0 0.0
    %1673 = vmatprep.subr.mxu0 0.0
    %1674 = vmatpush1.msra.mxu0 0.0
    %1675 = vmatprep.subr.mxu0 0.0
    %1676 = vmatpush1.msra.mxu0 0.0
    %1677 = vmatprep.subr.mxu0 0.0
    %1678 = vmatpush1.msra.mxu0 0.0
    %1679 = vmatprep.subr.mxu0 0.0
    %1680 = vmatpush1.msra.mxu0 0.0
    %1681 = vmatprep.mubr.f32.mxu0 0.0
    %1682 = vmatmul.mubr.f32.gmra.mrb[0].mxu0 %v1615
    %v1683 = vpop.f32.mrb[0].mxu0
    %v1684 = vadd.f32 0.0, %v1683
    %v1685 = vpop.f32.mrb[0].mxu0
    %1686 = vdwg.mxu0
    %v1687 = vand.u32 %v36, 3
    %vm1688 = vcmp.eq.s32.totalorder %v1687, 0
    %v1690 = vrot.slane %v1684, 7
    %v1692 = vsel %vm52, 0.0, %v1690
    %v1693 = vsel %vm1688, 0.0, %v1692
    %vm1694 = vcmp.eq.s32.totalorder %v1687, 3
    %v1695 = vrot.slane %v1684, 1
    %v1697 = vsel %vm73, %v1695, 0.0
    %v1698 = vsel %vm1694, 0.0, %v1697
    %1699 = vrot.lane.b32.xlu0 %v1684, 16
    %v1700 = vpop.permute.xlu0 %1699
    %1703 = vrot.lane.b32.xlu0 %v1698, 32
    %v1704 = vpop.permute.xlu0 %1703
    %v1706 = vsel %vm308, %v1693, %v1700
    %v1707 = vsel %vm913, %v1706, %v1704
    %v1708 = vld [vmem:[#allocation2 + $0x128] sm:$0xff]
    %v1709 = vld [vmem:[#allocation2 + $0x130] sm:$0xff]
    %v1710 = vld [vmem:[#allocation2 + $0x138] sm:$0xff]
    %v1711 = vld [vmem:[#allocation2 + $0x140] sm:$0xff]
    %v1712 = vld [vmem:[#allocation2 + $0x148] sm:$0xff]
    %v1713 = vld [vmem:[#allocation2 + $0x150] sm:$0xff]
    %v1714 = vlaneseq
    %v1715 = vshrl.u32 %v1714, 7
    %v1716 = vsub.s32 2, %v1715
    %v1717 = vrot.slane %v29, %v1716
    %v1719 = vsel %vm1173, %v1707, 0
    %1721 = vmatprep.subr.mxu0 0.0
    %1722 = vmatpush1.msra.mxu0 %v1708
    %1723 = vmatprep.subr.mxu0 0.0
    %1724 = vmatpush1.msra.mxu0 %v1709
    %1725 = vmatprep.subr.mxu0 0.0
    %1726 = vmatpush1.msra.mxu0 %v1710
    %1727 = vmatprep.subr.mxu0 0.0
    %1728 = vmatpush1.msra.mxu0 %v1711
    %1729 = vmatprep.subr.mxu0 0.0
    %1730 = vmatpush1.msra.mxu0 %v1712
    %1731 = vmatprep.subr.mxu0 0.0
    %1732 = vmatpush1.msra.mxu0 %v1713
    %1733 = vmatprep.subr.mxu0 0.0
    %1734 = vmatpush1.msra.mxu0 0.0
    %1735 = vmatprep.subr.mxu0 0.0
    %1736 = vmatpush1.msra.mxu0 0.0
    %1737 = vmatprep.subr.mxu0 0.0
    %1738 = vmatpush1.msra.mxu0 0.0
    %1739 = vmatprep.subr.mxu0 0.0
    %1740 = vmatpush1.msra.mxu0 0.0
    %1741 = vmatprep.subr.mxu0 0.0
    %1742 = vmatpush1.msra.mxu0 0.0
    %1743 = vmatprep.subr.mxu0 0.0
    %1744 = vmatpush1.msra.mxu0 0.0
    %1745 = vmatprep.subr.mxu0 0.0
    %1746 = vmatpush1.msra.mxu0 0.0
    %1747 = vmatprep.subr.mxu0 0.0
    %1748 = vmatpush1.msra.mxu0 0.0
    %1749 = vmatprep.subr.mxu0 0.0
    %1750 = vmatpush1.msra.mxu0 0.0
    %1751 = vmatprep.subr.mxu0 0.0
    %1752 = vmatpush1.msra.mxu0 0.0
    %1753 = vmatprep.subr.mxu0 0.0
    %1754 = vmatpush1.msra.mxu0 0.0
    %1755 = vmatprep.subr.mxu0 0.0
    %1756 = vmatpush1.msra.mxu0 0.0
    %1757 = vmatprep.subr.mxu0 0.0
    %1758 = vmatpush1.msra.mxu0 0.0
    %1759 = vmatprep.subr.mxu0 0.0
    %1760 = vmatpush1.msra.mxu0 0.0
    %1761 = vmatprep.subr.mxu0 0.0
    %1762 = vmatpush1.msra.mxu0 0.0
    %1763 = vmatprep.subr.mxu0 0.0
    %1764 = vmatpush1.msra.mxu0 0.0
    %1765 = vmatprep.subr.mxu0 0.0
    %1766 = vmatpush1.msra.mxu0 0.0
    %1767 = vmatprep.subr.mxu0 0.0
    %1768 = vmatpush1.msra.mxu0 0.0
    %1769 = vmatprep.subr.mxu0 0.0
    %1770 = vmatpush1.msra.mxu0 0.0
    %1771 = vmatprep.subr.mxu0 0.0
    %1772 = vmatpush1.msra.mxu0 0.0
    %1773 = vmatprep.subr.mxu0 0.0
    %1774 = vmatpush1.msra.mxu0 0.0
    %1775 = vmatprep.subr.mxu0 0.0
    %1776 = vmatpush1.msra.mxu0 0.0
    %1777 = vmatprep.subr.mxu0 0.0
    %1778 = vmatpush1.msra.mxu0 0.0
    %1779 = vmatprep.subr.mxu0 0.0
    %1780 = vmatpush1.msra.mxu0 0.0
    %1781 = vmatprep.subr.mxu0 0.0
    %1782 = vmatpush1.msra.mxu0 0.0
    %1783 = vmatprep.subr.mxu0 0.0
    %1784 = vmatpush1.msra.mxu0 0.0
    %1785 = vmatprep.mubr.f32.mxu0 0.0
    %1786 = vmatmul.mubr.f32.gmra.mrb[0].mxu0 %v1719
    %v1787 = vpop.f32.mrb[0].mxu0
    %v1788 = vadd.f32 %v1717, %v1787
    %v1789 = vpop.f32.mrb[0].mxu0
    %1790 = vdwg.mxu0
    %v1791 = vmax.f32 %v1788, 0.0
    %v1793 = vrot.slane %v1791, 7
    %v1795 = vsel %vm52, 0.0, %v1793
    %v1796 = vsel %vm1688, 0.0, %v1795
    %v1797 = vrot.slane %v1791, 1
    %v1799 = vsel %vm73, %v1797, 0.0
    %v1800 = vsel %vm1694, 0.0, %v1799
    %1801 = vrot.lane.b32.xlu0 %v1791, 16
    %v1802 = vpop.permute.xlu0 %1801
    %1805 = vrot.lane.b32.xlu0 %v1800, 32
    %v1806 = vpop.permute.xlu0 %1805
    %v1808 = vsel %vm308, %v1796, %v1802
    %v1809 = vsel %vm913, %v1808, %v1806
    %v1810 = vld [vmem:[#allocation2 + $0x158] sm:$0xff]
    %v1811 = vld [vmem:[#allocation2 + $0x160] sm:$0xff]
    %v1812 = vld [vmem:[#allocation2 + $0x168] sm:$0xff]
    %v1813 = vld [vmem:[#allocation2 + $0x170] sm:$0xff]
    %v1814 = vld [vmem:[#allocation2 + $0x178] sm:$0xff]
    %v1815 = vld [vmem:[#allocation2 + $0x180] sm:$0xff]
    %v1816 = vlaneseq
    %v1817 = vshrl.u32 %v1816, 7
    %v1818 = vsub.s32 3, %v1817
    %v1819 = vrot.slane %v29, %v1818
    %v1821 = vsel %vm1173, %v1809, 0
    %1823 = vmatprep.subr.mxu0 0.0
    %1824 = vmatpush1.msra.mxu0 %v1810
    %1825 = vmatprep.subr.mxu0 0.0
    %1826 = vmatpush1.msra.mxu0 %v1811
    %1827 = vmatprep.subr.mxu0 0.0
    %1828 = vmatpush1.msra.mxu0 %v1812
    %1829 = vmatprep.subr.mxu0 0.0
    %1830 = vmatpush1.msra.mxu0 %v1813
    %1831 = vmatprep.subr.mxu0 0.0
    %1832 = vmatpush1.msra.mxu0 %v1814
    %1833 = vmatprep.subr.mxu0 0.0
    %1834 = vmatpush1.msra.mxu0 %v1815
    %1835 = vmatprep.subr.mxu0 0.0
    %1836 = vmatpush1.msra.mxu0 0.0
    %1837 = vmatprep.subr.mxu0 0.0
    %1838 = vmatpush1.msra.mxu0 0.0
    %1839 = vmatprep.subr.mxu0 0.0
    %1840 = vmatpush1.msra.mxu0 0.0
    %1841 = vmatprep.subr.mxu0 0.0
    %1842 = vmatpush1.msra.mxu0 0.0
    %1843 = vmatprep.subr.mxu0 0.0
    %1844 = vmatpush1.msra.mxu0 0.0
    %1845 = vmatprep.subr.mxu0 0.0
    %1846 = vmatpush1.msra.mxu0 0.0
    %1847 = vmatprep.subr.mxu0 0.0
    %1848 = vmatpush1.msra.mxu0 0.0
    %1849 = vmatprep.subr.mxu0 0.0
    %1850 = vmatpush1.msra.mxu0 0.0
    %1851 = vmatprep.subr.mxu0 0.0
    %1852 = vmatpush1.msra.mxu0 0.0
    %1853 = vmatprep.subr.mxu0 0.0
    %1854 = vmatpush1.msra.mxu0 0.0
    %1855 = vmatprep.subr.mxu0 0.0
    %1856 = vmatpush1.msra.mxu0 0.0
    %1857 = vmatprep.subr.mxu0 0.0
    %1858 = vmatpush1.msra.mxu0 0.0
    %1859 = vmatprep.subr.mxu0 0.0
    %1860 = vmatpush1.msra.mxu0 0.0
    %1861 = vmatprep.subr.mxu0 0.0
    %1862 = vmatpush1.msra.mxu0 0.0
    %1863 = vmatprep.subr.mxu0 0.0
    %1864 = vmatpush1.msra.mxu0 0.0
    %1865 = vmatprep.subr.mxu0 0.0
    %1866 = vmatpush1.msra.mxu0 0.0
    %1867 = vmatprep.subr.mxu0 0.0
    %1868 = vmatpush1.msra.mxu0 0.0
    %1869 = vmatprep.subr.mxu0 0.0
    %1870 = vmatpush1.msra.mxu0 0.0
    %1871 = vmatprep.subr.mxu0 0.0
    %1872 = vmatpush1.msra.mxu0 0.0
    %1873 = vmatprep.subr.mxu0 0.0
    %1874 = vmatpush1.msra.mxu0 0.0
    %1875 = vmatprep.subr.mxu0 0.0
    %1876 = vmatpush1.msra.mxu0 0.0
    %1877 = vmatprep.subr.mxu0 0.0
    %1878 = vmatpush1.msra.mxu0 0.0
    %1879 = vmatprep.subr.mxu0 0.0
    %1880 = vmatpush1.msra.mxu0 0.0
    %1881 = vmatprep.subr.mxu0 0.0
    %1882 = vmatpush1.msra.mxu0 0.0
    %1883 = vmatprep.subr.mxu0 0.0
    %1884 = vmatpush1.msra.mxu0 0.0
    %1885 = vmatprep.subr.mxu0 0.0
    %1886 = vmatpush1.msra.mxu0 0.0
    %1887 = vmatprep.mubr.f32.mxu0 0.0
    %1888 = vmatmul.mubr.f32.gmra.mrb[0].mxu0 %v1821
    %v1889 = vpop.f32.mrb[0].mxu0
    %v1890 = vadd.f32 %v1819, %v1889
    %v1891 = vpop.f32.mrb[0].mxu0
    %1892 = vdwg.mxu0
    %v1893 = vmax.f32 %v1890, 0.0
    %v1894 = vadd.f32 %v1893, %v1684
    %v1896 = vrot.slane %v1894, 7
    %v1898 = vsel %vm52, 0.0, %v1896
    %v1899 = vsel %vm1688, 0.0, %v1898
    %v1900 = vrot.slane %v1894, 1
    %v1902 = vsel %vm73, %v1900, 0.0
    %v1903 = vsel %vm1694, 0.0, %v1902
    %1904 = vrot.lane.b32.xlu0 %v1894, 16
    %v1905 = vpop.permute.xlu0 %1904
    %1908 = vrot.lane.b32.xlu0 %v1903, 32
    %v1909 = vpop.permute.xlu0 %1908
    %v1911 = vsel %vm308, %v1899, %v1905
    %v1912 = vsel %vm913, %v1911, %v1909
    %v1913 = vld [vmem:[#allocation2 + $0x188] sm:$0xff]
    %v1914 = vld [vmem:[#allocation2 + $0x190] sm:$0xff]
    %v1915 = vld [vmem:[#allocation2 + $0x198] sm:$0xff]
    %v1916 = vld [vmem:[#allocation2 + $0x1a0] sm:$0xff]
    %v1917 = vld [vmem:[#allocation2 + $0x1a8] sm:$0xff]
    %v1918 = vld [vmem:[#allocation2 + $0x1b0] sm:$0xff]
    %v1919 = vlaneseq
    %v1920 = vshrl.u32 %v1919, 7
    %v1921 = vsub.s32 4, %v1920
    %v1922 = vrot.slane %v29, %v1921
    %v1924 = vsel %vm1173, %v1912, 0
    %1926 = vmatprep.subr.mxu0 0.0
    %1927 = vmatpush1.msra.mxu0 %v1913
    %1928 = vmatprep.subr.mxu0 0.0
    %1929 = vmatpush1.msra.mxu0 %v1914
    %1930 = vmatprep.subr.mxu0 0.0
    %1931 = vmatpush1.msra.mxu0 %v1915
    %1932 = vmatprep.subr.mxu0 0.0
    %1933 = vmatpush1.msra.mxu0 %v1916
    %1934 = vmatprep.subr.mxu0 0.0
    %1935 = vmatpush1.msra.mxu0 %v1917
    %1936 = vmatprep.subr.mxu0 0.0
    %1937 = vmatpush1.msra.mxu0 %v1918
    %1938 = vmatprep.subr.mxu0 0.0
    %1939 = vmatpush1.msra.mxu0 0.0
    %1940 = vmatprep.subr.mxu0 0.0
    %1941 = vmatpush1.msra.mxu0 0.0
    %1942 = vmatprep.subr.mxu0 0.0
    %1943 = vmatpush1.msra.mxu0 0.0
    %1944 = vmatprep.subr.mxu0 0.0
    %1945 = vmatpush1.msra.mxu0 0.0
    %1946 = vmatprep.subr.mxu0 0.0
    %1947 = vmatpush1.msra.mxu0 0.0
    %1948 = vmatprep.subr.mxu0 0.0
    %1949 = vmatpush1.msra.mxu0 0.0
    %1950 = vmatprep.subr.mxu0 0.0
    %1951 = vmatpush1.msra.mxu0 0.0
    %1952 = vmatprep.subr.mxu0 0.0
    %1953 = vmatpush1.msra.mxu0 0.0
    %1954 = vmatprep.subr.mxu0 0.0
    %1955 = vmatpush1.msra.mxu0 0.0
    %1956 = vmatprep.subr.mxu0 0.0
    %1957 = vmatpush1.msra.mxu0 0.0
    %1958 = vmatprep.subr.mxu0 0.0
    %1959 = vmatpush1.msra.mxu0 0.0
    %1960 = vmatprep.subr.mxu0 0.0
    %1961 = vmatpush1.msra.mxu0 0.0
    %1962 = vmatprep.subr.mxu0 0.0
    %1963 = vmatpush1.msra.mxu0 0.0
    %1964 = vmatprep.subr.mxu0 0.0
    %1965 = vmatpush1.msra.mxu0 0.0
    %1966 = vmatprep.subr.mxu0 0.0
    %1967 = vmatpush1.msra.mxu0 0.0
    %1968 = vmatprep.subr.mxu0 0.0
    %1969 = vmatpush1.msra.mxu0 0.0
    %1970 = vmatprep.subr.mxu0 0.0
    %1971 = vmatpush1.msra.mxu0 0.0
    %1972 = vmatprep.subr.mxu0 0.0
    %1973 = vmatpush1.msra.mxu0 0.0
    %1974 = vmatprep.subr.mxu0 0.0
    %1975 = vmatpush1.msra.mxu0 0.0
    %1976 = vmatprep.subr.mxu0 0.0
    %1977 = vmatpush1.msra.mxu0 0.0
    %1978 = vmatprep.subr.mxu0 0.0
    %1979 = vmatpush1.msra.mxu0 0.0
    %1980 = vmatprep.subr.mxu0 0.0
    %1981 = vmatpush1.msra.mxu0 0.0
    %1982 = vmatprep.subr.mxu0 0.0
    %1983 = vmatpush1.msra.mxu0 0.0
    %1984 = vmatprep.subr.mxu0 0.0
    %1985 = vmatpush1.msra.mxu0 0.0
    %1986 = vmatprep.subr.mxu0 0.0
    %1987 = vmatpush1.msra.mxu0 0.0
    %1988 = vmatprep.subr.mxu0 0.0
    %1989 = vmatpush1.msra.mxu0 0.0
    %1990 = vmatprep.mubr.f32.mxu0 0.0
    %1991 = vmatmul.mubr.f32.gmra.mrb[0].mxu0 %v1924
    %v1992 = vpop.f32.mrb[0].mxu0
    %v1993 = vadd.f32 %v1922, %v1992
    %v1994 = vpop.f32.mrb[0].mxu0
    %1995 = vdwg.mxu0
    %v1996 = vmax.f32 %v1993, 0.0
    %v1998 = vrot.slane %v1996, 7
    %v2000 = vsel %vm52, 0.0, %v1998
    %v2001 = vsel %vm1688, 0.0, %v2000
    %v2002 = vrot.slane %v1996, 1
    %v2004 = vsel %vm73, %v2002, 0.0
    %v2005 = vsel %vm1694, 0.0, %v2004
    %2006 = vrot.lane.b32.xlu0 %v1996, 16
    %v2007 = vpop.permute.xlu0 %2006
    %2010 = vrot.lane.b32.xlu0 %v2005, 32
    %v2011 = vpop.permute.xlu0 %2010
    %v2013 = vsel %vm308, %v2001, %v2007
    %v2014 = vsel %vm913, %v2013, %v2011
    %v2015 = vld [vmem:[#allocation2 + $0x1b8] sm:$0xff]
    %v2016 = vld [vmem:[#allocation2 + $0x1c0] sm:$0xff]
    %v2017 = vld [vmem:[#allocation2 + $0x1c8] sm:$0xff]
    %v2018 = vld [vmem:[#allocation2 + $0x1d0] sm:$0xff]
    %v2019 = vld [vmem:[#allocation2 + $0x1d8] sm:$0xff]
    %v2020 = vld [vmem:[#allocation2 + $0x1e0] sm:$0xff]
    %v2021 = vlaneseq
    %v2022 = vshrl.u32 %v2021, 7
    %v2023 = vsub.s32 5, %v2022
    %v2024 = vrot.slane %v29, %v2023
    %v2026 = vsel %vm1173, %v2014, 0
    %2028 = vmatprep.subr.mxu0 0.0
    %2029 = vmatpush1.msra.mxu0 %v2015
    %2030 = vmatprep.subr.mxu0 0.0
    %2031 = vmatpush1.msra.mxu0 %v2016
    %2032 = vmatprep.subr.mxu0 0.0
    %2033 = vmatpush1.msra.mxu0 %v2017
    %2034 = vmatprep.subr.mxu0 0.0
    %2035 = vmatpush1.msra.mxu0 %v2018
    %2036 = vmatprep.subr.mxu0 0.0
    %2037 = vmatpush1.msra.mxu0 %v2019
    %2038 = vmatprep.subr.mxu0 0.0
    %2039 = vmatpush1.msra.mxu0 %v2020
    %2040 = vmatprep.subr.mxu0 0.0
    %2041 = vmatpush1.msra.mxu0 0.0
    %2042 = vmatprep.subr.mxu0 0.0
    %2043 = vmatpush1.msra.mxu0 0.0
    %2044 = vmatprep.subr.mxu0 0.0
    %2045 = vmatpush1.msra.mxu0 0.0
    %2046 = vmatprep.subr.mxu0 0.0
    %2047 = vmatpush1.msra.mxu0 0.0
    %2048 = vmatprep.subr.mxu0 0.0
    %2049 = vmatpush1.msra.mxu0 0.0
    %2050 = vmatprep.subr.mxu0 0.0
    %2051 = vmatpush1.msra.mxu0 0.0
    %2052 = vmatprep.subr.mxu0 0.0
    %2053 = vmatpush1.msra.mxu0 0.0
    %2054 = vmatprep.subr.mxu0 0.0
    %2055 = vmatpush1.msra.mxu0 0.0
    %2056 = vmatprep.subr.mxu0 0.0
    %2057 = vmatpush1.msra.mxu0 0.0
    %2058 = vmatprep.subr.mxu0 0.0
    %2059 = vmatpush1.msra.mxu0 0.0
    %2060 = vmatprep.subr.mxu0 0.0
    %2061 = vmatpush1.msra.mxu0 0.0
    %2062 = vmatprep.subr.mxu0 0.0
    %2063 = vmatpush1.msra.mxu0 0.0
    %2064 = vmatprep.subr.mxu0 0.0
    %2065 = vmatpush1.msra.mxu0 0.0
    %2066 = vmatprep.subr.mxu0 0.0
    %2067 = vmatpush1.msra.mxu0 0.0
    %2068 = vmatprep.subr.mxu0 0.0
    %2069 = vmatpush1.msra.mxu0 0.0
    %2070 = vmatprep.subr.mxu0 0.0
    %2071 = vmatpush1.msra.mxu0 0.0
    %2072 = vmatprep.subr.mxu0 0.0
    %2073 = vmatpush1.msra.mxu0 0.0
    %2074 = vmatprep.subr.mxu0 0.0
    %2075 = vmatpush1.msra.mxu0 0.0
    %2076 = vmatprep.subr.mxu0 0.0
    %2077 = vmatpush1.msra.mxu0 0.0
    %2078 = vmatprep.subr.mxu0 0.0
    %2079 = vmatpush1.msra.mxu0 0.0
    %2080 = vmatprep.subr.mxu0 0.0
    %2081 = vmatpush1.msra.mxu0 0.0
    %2082 = vmatprep.subr.mxu0 0.0
    %2083 = vmatpush1.msra.mxu0 0.0
    %2084 = vmatprep.subr.mxu0 0.0
    %2085 = vmatpush1.msra.mxu0 0.0
    %2086 = vmatprep.subr.mxu0 0.0
    %2087 = vmatpush1.msra.mxu0 0.0
    %2088 = vmatprep.subr.mxu0 0.0
    %2089 = vmatpush1.msra.mxu0 0.0
    %2090 = vmatprep.subr.mxu0 0.0
    %2091 = vmatpush1.msra.mxu0 0.0
    %2092 = vmatprep.mubr.f32.mxu0 0.0
    %2093 = vmatmul.mubr.f32.gmra.mrb[0].mxu0 %v2026
    %v2094 = vpop.f32.mrb[0].mxu0
    %v2095 = vadd.f32 %v2024, %v2094
    %v2096 = vpop.f32.mrb[0].mxu0
    %2097 = vdwg.mxu0
    %v2098 = vmax.f32 %v2095, 0.0
    %v2099 = vadd.f32 %v2098, %v1894
    %v2101 = vrot.slane %v2099, 3
    %v2103 = vrot.slane %v2099, 6
    %v2105 = vsel %vm52, %v2101, %v2103
    %v2106 = vld [vmem:[#allocation2 + $0x1e8] sm:$0xff]
    %v2107 = vld [vmem:[#allocation2 + $0x1f0] sm:$0xff]
    %v2108 = vlaneseq
    %v2109 = vshrl.u32 %v2108, 7
    %v2110 = vsub.s32 6, %v2109
    %v2111 = vrot.slane %v29, %v2110
    %v2113 = vsel %vm308, %v2105, 0
    %2115 = vmatprep.subr.mxu0 0.0
    %2116 = vmatpush1.msra.mxu0 %v2106
    %2117 = vmatprep.subr.mxu0 0.0
    %2118 = vmatpush1.msra.mxu0 %v2107
    %2119 = vmatprep.subr.mxu0 0.0
    %2120 = vmatpush1.msra.mxu0 0.0
    %2121 = vmatprep.subr.mxu0 0.0
    %2122 = vmatpush1.msra.mxu0 0.0
    %2123 = vmatprep.subr.mxu0 0.0
    %2124 = vmatpush1.msra.mxu0 0.0
    %2125 = vmatprep.subr.mxu0 0.0
    %2126 = vmatpush1.msra.mxu0 0.0
    %2127 = vmatprep.subr.mxu0 0.0
    %2128 = vmatpush1.msra.mxu0 0.0
    %2129 = vmatprep.subr.mxu0 0.0
    %2130 = vmatpush1.msra.mxu0 0.0
    %2131 = vmatprep.subr.mxu0 0.0
    %2132 = vmatpush1.msra.mxu0 0.0
    %2133 = vmatprep.subr.mxu0 0.0
    %2134 = vmatpush1.msra.mxu0 0.0
    %2135 = vmatprep.subr.mxu0 0.0
    %2136 = vmatpush1.msra.mxu0 0.0
    %2137 = vmatprep.subr.mxu0 0.0
    %2138 = vmatpush1.msra.mxu0 0.0
    %2139 = vmatprep.subr.mxu0 0.0
    %2140 = vmatpush1.msra.mxu0 0.0
    %2141 = vmatprep.subr.mxu0 0.0
    %2142 = vmatpush1.msra.mxu0 0.0
    %2143 = vmatprep.subr.mxu0 0.0
    %2144 = vmatpush1.msra.mxu0 0.0
    %2145 = vmatprep.subr.mxu0 0.0
    %2146 = vmatpush1.msra.mxu0 0.0
    %2147 = vmatprep.subr.mxu0 0.0
    %2148 = vmatpush1.msra.mxu0 0.0
    %2149 = vmatprep.subr.mxu0 0.0
    %2150 = vmatpush1.msra.mxu0 0.0
    %2151 = vmatprep.subr.mxu0 0.0
    %2152 = vmatpush1.msra.mxu0 0.0
    %2153 = vmatprep.subr.mxu0 0.0
    %2154 = vmatpush1.msra.mxu0 0.0
    %2155 = vmatprep.subr.mxu0 0.0
    %2156 = vmatpush1.msra.mxu0 0.0
    %2157 = vmatprep.subr.mxu0 0.0
    %2158 = vmatpush1.msra.mxu0 0.0
    %2159 = vmatprep.subr.mxu0 0.0
    %2160 = vmatpush1.msra.mxu0 0.0
    %2161 = vmatprep.subr.mxu0 0.0
    %2162 = vmatpush1.msra.mxu0 0.0
    %2163 = vmatprep.subr.mxu0 0.0
    %2164 = vmatpush1.msra.mxu0 0.0
    %2165 = vmatprep.subr.mxu0 0.0
    %2166 = vmatpush1.msra.mxu0 0.0
    %2167 = vmatprep.subr.mxu0 0.0
    %2168 = vmatpush1.msra.mxu0 0.0
    %2169 = vmatprep.subr.mxu0 0.0
    %2170 = vmatpush1.msra.mxu0 0.0
    %2171 = vmatprep.subr.mxu0 0.0
    %2172 = vmatpush1.msra.mxu0 0.0
    %2173 = vmatprep.subr.mxu0 0.0
    %2174 = vmatpush1.msra.mxu0 0.0
    %2175 = vmatprep.subr.mxu0 0.0
    %2176 = vmatpush1.msra.mxu0 0.0
    %2177 = vmatprep.subr.mxu0 0.0
    %2178 = vmatpush1.msra.mxu0 0.0
    %2179 = vmatprep.mubr.f32.mxu0 0.0
    %2180 = vmatmul.mubr.f32.gmra.mrb[0].mxu0 %v2113
    %v2181 = vpop.f32.mrb[0].mxu0
    %v2182 = vadd.f32 %v2111, %v2181
    %v2183 = vpop.f32.mrb[0].mxu0
    %2184 = vdwg.mxu0
    %v2185 = vmax.f32 %v2182, 0.0
    %v2186 = vmul.f32 %v2185, %v2185
    %vm2187 = vcmask 58368
    %v2188 = vsel %vm2187, %v2186, 0.0
    %2189 = vadd.xlane.f32.xlu0 %v2188
    %v2190 = vpop.xlane.xlu0 %2189
    %v2191 = vrsqrt.pop %v2190
    %v2192 = vmul.f32 %v2190, %v2191
    %vm2193 = vcmp.eq.f32.partialorder %v2190, inf
    %v2194 = vsel %vm2193, %v2190, %v2192
    %vm2195 = vcmp.eq.f32.partialorder %v2190, 0.0
    %v2196 = vand.u32 %v2190, 2147483648
    %v2197 = vsel %vm2195, %v2196, %v2194
    %v2198 = vmax.f32 %v2197, 1e-12
    %v2199 = vrcp.pop %v2198
    %v2200 = vmul.f32 %v2185, %v2199
    %v2201 = vmax.f32 %v2200, 0.0
    %v2202 = vsel %vm2187, %v2201, 0.0
    %v2203 = vrot.slane %v2202, 4
    %v2204 = vadd.f32 %v2202, %v2203
    %v2205 = vrot.slane %v2204, 2
    %v2206 = vadd.f32 %v2204, %v2205
    %v2207 = vrot.slane %v2206, 1
    %v2208 = vadd.f32 %v2206, %v2207
    %v2209 = vrcp.pop 2.0
    %v2210 = vmul.f32 %v2208, %v2209
    %v2211 = vsub.f32 %v2201, %v2210
    %v2212 = vmul.f32 %v2211, %v2211
    %v2213 = vsel %vm2187, %v2212, 0.0
    %v2214 = vrot.slane %v2213, 4
    %v2215 = vadd.f32 %v2213, %v2214
    %v2216 = vrot.slane %v2215, 2
    %v2217 = vadd.f32 %v2215, %v2216
    %v2218 = vrot.slane %v2217, 1
    %v2219 = vadd.f32 %v2217, %v2218
    %v2220 = vmul.f32 %v2219, %v2209
    %v2221 = vadd.f32 %v2220, 1e-05
    %v2222 = vrsqrt.pop %v2221
    %v2223 = vmul.f32 %v2211, %v2222
    %v2224 = vlaneseq
    %v2225 = vshrl.u32 %v2224, 7
    %v2226 = vsub.s32 7, %v2225
    %v2227 = vrot.slane %v29, %v2226
    %v2228 = vmul.f32 %v2223, %v2227
    %v2229 = vlaneseq
    %v2230 = vshrl.u32 %v2229, 7
    %v2231 = vsub.s32 0, %v2230
    %v2232 = vrot.slane %v30, %v2231
    %v2233 = vadd.f32 %v2228, %v2232
    %v2234 = vld [vmem:[#allocation2 + $0x1f8] sm:$0xff]
    %v2235 = vlaneseq
    %v2236 = vshrl.u32 %v2235, 7
    %v2237 = vsub.s32 1, %v2236
    %v2238 = vrot.slane %v30, %v2237
    %v2240 = vsel %vm123, %v2233, 0
    %2242 = vmatprep.subr.mxu0 0.0
    %2243 = vmatpush1.msra.mxu0 %v2234
    %2244 = vmatprep.subr.mxu0 0.0
    %2245 = vmatpush1.msra.mxu0 0.0
    %2246 = vmatprep.subr.mxu0 0.0
    %2247 = vmatpush1.msra.mxu0 0.0
    %2248 = vmatprep.subr.mxu0 0.0
    %2249 = vmatpush1.msra.mxu0 0.0
    %2250 = vmatprep.subr.mxu0 0.0
    %2251 = vmatpush1.msra.mxu0 0.0
    %2252 = vmatprep.subr.mxu0 0.0
    %2253 = vmatpush1.msra.mxu0 0.0
    %2254 = vmatprep.subr.mxu0 0.0
    %2255 = vmatpush1.msra.mxu0 0.0
    %2256 = vmatprep.subr.mxu0 0.0
    %2257 = vmatpush1.msra.mxu0 0.0
    %2258 = vmatprep.subr.mxu0 0.0
    %2259 = vmatpush1.msra.mxu0 0.0
    %2260 = vmatprep.subr.mxu0 0.0
    %2261 = vmatpush1.msra.mxu0 0.0
    %2262 = vmatprep.subr.mxu0 0.0
    %2263 = vmatpush1.msra.mxu0 0.0
    %2264 = vmatprep.subr.mxu0 0.0
    %2265 = vmatpush1.msra.mxu0 0.0
    %2266 = vmatprep.subr.mxu0 0.0
    %2267 = vmatpush1.msra.mxu0 0.0
    %2268 = vmatprep.subr.mxu0 0.0
    %2269 = vmatpush1.msra.mxu0 0.0
    %2270 = vmatprep.subr.mxu0 0.0
    %2271 = vmatpush1.msra.mxu0 0.0
    %2272 = vmatprep.subr.mxu0 0.0
    %2273 = vmatpush1.msra.mxu0 0.0
    %2274 = vmatprep.subr.mxu0 0.0
    %2275 = vmatpush1.msra.mxu0 0.0
    %2276 = vmatprep.subr.mxu0 0.0
    %2277 = vmatpush1.msra.mxu0 0.0
    %2278 = vmatprep.subr.mxu0 0.0
    %2279 = vmatpush1.msra.mxu0 0.0
    %2280 = vmatprep.subr.mxu0 0.0
    %2281 = vmatpush1.msra.mxu0 0.0
    %2282 = vmatprep.subr.mxu0 0.0
    %2283 = vmatpush1.msra.mxu0 0.0
    %2284 = vmatprep.subr.mxu0 0.0
    %2285 = vmatpush1.msra.mxu0 0.0
    %2286 = vmatprep.subr.mxu0 0.0
    %2287 = vmatpush1.msra.mxu0 0.0
    %2288 = vmatprep.subr.mxu0 0.0
    %2289 = vmatpush1.msra.mxu0 0.0
    %2290 = vmatprep.subr.mxu0 0.0
    %2291 = vmatpush1.msra.mxu0 0.0
    %2292 = vmatprep.subr.mxu0 0.0
    %2293 = vmatpush1.msra.mxu0 0.0
    %2294 = vmatprep.subr.mxu0 0.0
    %2295 = vmatpush1.msra.mxu0 0.0
    %2296 = vmatprep.subr.mxu0 0.0
    %2297 = vmatpush1.msra.mxu0 0.0
    %2298 = vmatprep.subr.mxu0 0.0
    %2299 = vmatpush1.msra.mxu0 0.0
    %2300 = vmatprep.subr.mxu0 0.0
    %2301 = vmatpush1.msra.mxu0 0.0
    %2302 = vmatprep.subr.mxu0 0.0
    %2303 = vmatpush1.msra.mxu0 0.0
    %2304 = vmatprep.subr.mxu0 0.0
    %2305 = vmatpush1.msra.mxu0 0.0
    %2306 = vmatprep.mubr.f32.mxu0 0.0
    %2307 = vmatmul.mubr.f32.gmra.mrb[0].mxu0 %v2240
    %v2308 = vpop.f32.mrb[0].mxu0
    %v2309 = vadd.f32 %v2238, %v2308
    %v2310 = vpop.f32.mrb[0].mxu0
    %2311 = vdwg.mxu0
    %2312 = vst [vmem:[%s3] sm:$0x3] 0.0
    %2313 = vst.msk [vmem:[%s3] sm:$0x3] %vm2187, %v2200
    %2315 = vrot.lane.b32.xlu0 %v2309, 8
    %v2316 = vpop.permute.xlu0 %2315
    %vm2318 = vcmask 99392
    %2319 = vst.msk [vmem:[%s3] sm:$0x3] %vm2318, %v2316
    // Predicated region
    $region18: #{_lambda_.1} parent=1 // pred_check
      _
    $region19: #{_lambda_.1} parent=1 // pred_check_branch
      %2321 = sbr.rel (0) target = $region21
    $region20: #{_lambda_.1} parent=1 // pred_region
      _
    $region21: #{_lambda_.1} parent=1 // pred_fallthru
      _
    // Predicated region
    $region22: #{_lambda_.1} parent=1 // pred_check
      _
    $region23: #{_lambda_.1} parent=1 // pred_check_branch
      %2323 = sbr.rel (0) target = $region25
    $region24: #{_lambda_.1} parent=1 // pred_region
      _
    $region25: #{_lambda_.1} parent=1 // pred_fallthru
      _
    %2324 = vsyncpa [#allocation3], 1

</llo_original>
